<compile_context>
chip_gen: v7x
topology: tpu7x:2x2x1
jax: 0.10.0
libtpu: 0.0.40
codegen_flags: <defaults>
</compile_context>

<pallas_src>
import math

import jax
import jax.numpy as jnp
from jax.experimental import pallas as pl
from jax.experimental.pallas import tpu as pltpu

EPS = 1e-5          # nn.BatchNorm1d default eps
VEC_W = 128         # lane width of the packed bias / row-vector slab


def _round_up(x, m):
    return (x + m - 1) // m * m


# ----------------------------------------------------------------------------
# Fused TargetAttention -> HIFN -> DNN head
# ----------------------------------------------------------------------------
def huim_fused(static_emb, target_emb, sequence_emb, mask, params, *, batch_tile=512):
    """static_emb (B,Fs) f32, target_emb (B,A) f32, sequence_emb (B,T,A) f32, mask (B,T) bool."""
    f32, bf16 = jnp.float32, jnp.bfloat16
    B, Fs = static_emb.shape
    _, T, A = sequence_emb.shape
    TA = T * A
    H = params["att_w1"].shape[1]
    TH = T * H
    F = Fs + A
    G1 = params["gate_w1"].shape[1]
    G2 = params["gate_w2"].shape[1]
    D1 = params["mlp_w1"].shape[1]
    D2 = params["mlp_w2"].shape[1]
    E1 = params["dnn_w1"].shape[1]
    E2 = params["dnn_w2"].shape[1]
    assert params["gate_w1"].shape[0] == F and params["mlp_w1"].shape[0] == F
    assert max(F, G1, G2, D1, D2, E1, E2, T) <= VEC_W, "bias-slab packing assumes widths <= 128"

    # ---- host-side weight folding (constant-folds under jit) -------------------------------
    # att_w1 rows: [Wt; Ws; Wd; Wp] for concat([t, s, t-s, t*s]).
    w1 = params["att_w1"]                                         # (4A, H)
    w_t, w_s, w_d, w_p = w1[:A], w1[A:2 * A], w1[2 * A:3 * A], w1[3 * A:]
    eye_t = jnp.eye(T, dtype=f32)
    # block-diagonal DIN weight for lhs = [seq | seq*tgt | tgt_tiled]  -> (TB, T*H)
    w1_big = jnp.concatenate([jnp.kron(eye_t, w_s - w_d),
                              jnp.kron(eye_t, w_p),
                              jnp.kron(eye_t, w_t + w_d)], axis=0).astype(bf16)   # (3*TA, TH)
    w2_col = jnp.kron(eye_t, params["att_w2"]).astype(bf16)       # (TH, T): score head per t
    expand_a = jnp.kron(eye_t, jnp.ones((1, A), f32))              # (T, TA): score -> A lanes
    gsum = jnp.tile(jnp.eye(A, dtype=f32), (T, 1))                 # (TA, A): sum over timesteps

    def tile_t(v):
        return jnp.tile(jnp.asarray(v, f32).reshape(1, -1), (1, T))

    # Dice (eval mode): p = sigmoid(x*scale + shift) with folded BatchNorm running stats.
    d_scale = params["att_dice_gamma"] / jnp.sqrt(params["att_dice_var"] + EPS)
    d_shift = params["att_dice_beta"] - params["att_dice_mean"] * d_scale
    alpha = params["att_alpha"]
    dice_slab = jnp.concatenate(
        [tile_t(params["att_b1"]),        # row 0: b1
         tile_t(alpha),                   # row 1: alpha
         tile_t(1.0 - alpha),             # row 2: 1 - alpha
         tile_t(d_scale),                 # row 3: dice BN scale
         tile_t(d_shift)], axis=0)        # row 4: dice BN shift            -> (5, TH) f32

    bn_scale = params["bn_gamma"] / jnp.sqrt(params["bn_var"] + EPS)
    bn_shift = params["bn_beta"] - params["bn_mean"] * bn_scale

    def row(v):
        v = jnp.asarray(v, f32).reshape(1, -1)
        return jnp.pad(v, ((0, 0), (0, VEC_W - v.shape[1])))

    vec_slab = jnp.concatenate([
        row(bn_scale), row(bn_shift),                                           # 0, 1
        row(params["gate_b1"]), row(params["gate_b2"]), row(params["gate_b3"]),  # 2, 3, 4
        row(params["mlp_b1"]), row(params["mlp_b2"]), row(params["mlp_b3"]),     # 5, 6, 7
        row(params["dnn_b1"]), row(params["dnn_b2"]),                            # 8, 9
        row(params["dnn_w3"].reshape(1, -1)),                                    # 10 (out row)
        params["att_b2"][0, 0] * jnp.ones((1, VEC_W), f32),                      # 11 (scalar b2)
        params["dnn_b3"][0, 0] * jnp.ones((1, VEC_W), f32),                      # 12 (scalar b3)
    ], axis=0)                                                                   # (13, 128) f32

    weights = (
        w1_big, dice_slab, w2_col, expand_a, gsum, vec_slab,
        params["gate_w1"].astype(bf16), params["gate_w2"].astype(bf16),
        params["gate_w3"].astype(bf16),
        params["mlp_w1"].astype(bf16), params["mlp_w2"].astype(bf16),
        params["mlp_w3"].astype(bf16),
        params["dnn_w1"].astype(bf16), params["dnn_w2"].astype(bf16),
    )

    # ---- fused kernel (all shape constants captured by closure) ----------------------------
    def kernel(static_ref, seq_ref, tgt_ref, mask_ref,
               w1b_ref, dice_ref, w2c_ref, expa_ref, gsum_ref, vec_ref,
               gw1_ref, gw2_ref, gw3_ref, mw1_ref, mw2_ref, mw3_ref,
               dw1_ref, dw2_ref, out_ref):
        seq_bf = seq_ref[...]                                     # (TB, T*A) bf16, lane-dense
        tgt_bf = tgt_ref[...]                                     # (TB, T*A) bf16 (target tiled)
        static_f = static_ref[...].astype(f32)                    # (TB, Fs)
        mask_f = mask_ref[...].astype(f32)                        # (TB, T)

        # ---- TargetAttention (DIN, use_softmax=False, eval mode) ----
        prod_bf = seq_bf * tgt_bf                                 # bf16 VPU (emulated on v5e)
        lhs = jnp.concatenate([seq_bf, prod_bf, tgt_bf], axis=-1)             # (TB, 3*T*A)
        h = jnp.dot(lhs, w1b_ref[...], preferred_element_type=f32)            # (TB, T*H)
        h = h + dice_ref[0:1, :]                                  # + b1 (tiled over T)

        # Dice, factored:  x * (alpha + p*(1-alpha)),  p = sigmoid(x*bn_scale + bn_shift)
        p = jax.nn.sigmoid(h * dice_ref[3:4, :] + dice_ref[4:5, :])
        h = h * (dice_ref[1:2, :] + p * dice_ref[2:3, :])

        # score head + mask + weighted sum over the sequence
        scores = jnp.dot(h.astype(bf16), w2c_ref[...], preferred_element_type=f32)    # (TB, T)
        scores = (scores + vec_ref[11:12, :T]) * mask_f           # + b2, masked (no softmax)
        s_tiled = jnp.dot(scores, expa_ref[...], preferred_element_type=f32)          # (TB, T*A)
        weighted = s_tiled * seq_bf.astype(f32)
        ctx = jnp.dot(weighted, gsum_ref[...], preferred_element_type=f32)            # (TB, A)

        # ---- HIFN: BatchNorm(eval, folded affine) -> gate MLP -> gated main MLP ----
        feat = jnp.concatenate([static_f, ctx], axis=-1)          # (TB, F) = [static | context]
        e = feat * vec_ref[0:1, :F] + vec_ref[1:2, :F]
        g1 = jax.nn.relu(jnp.dot(e.astype(bf16), gw1_ref[...],
                                 preferred_element_type=f32) + vec_ref[2:3, :G1])
        g2 = jax.nn.relu(jnp.dot(g1.astype(bf16), gw2_ref[...],
                                 preferred_element_type=f32) + vec_ref[3:4, :G2])
        # TODO(synk): MLPBlock's default output_activation is assumed None (linear gate).
        gate = jnp.dot(g2.astype(bf16), gw3_ref[...], preferred_element_type=f32) + vec_ref[4:5, :F]

        u = (gate * feat).astype(bf16)                            # dropout = identity (eval)
        m1 = jax.nn.relu(jnp.dot(u, mw1_ref[...], preferred_element_type=f32) + vec_ref[5:6, :D1])
        m2 = jax.nn.relu(jnp.dot(m1.astype(bf16), mw2_ref[...],
                                 preferred_element_type=f32) + vec_ref[6:7, :D2])
        e_out = jnp.dot(m2.astype(bf16), mw3_ref[...], preferred_element_type=f32) + vec_ref[7:8, :F]

        # ---- final DNN head with sigmoid output ----
        d1 = jax.nn.relu(jnp.dot(e_out.astype(bf16), dw1_ref[...],
                                 preferred_element_type=f32) + vec_ref[8:9, :E1])
        d2 = jax.nn.relu(jnp.dot(d1.astype(bf16), dw2_ref[...],
                                 preferred_element_type=f32) + vec_ref[9:10, :E2])
        # output layer (E2 -> 1): VPU multiply + lane reduce (no N=1 MXU matmul)
        logit = jnp.sum(d2 * vec_ref[10:11, :E2], axis=-1, keepdims=True) + vec_ref[12:13, :1]
        out_ref[...] = jax.nn.sigmoid(logit)                      # (TB, 1) f32

    # ---- batch tiling -----------------------------------------------------------------------
    # batch_tile is the main perf knob: sweep 512-2048 on v6e, keep <= ~512 on v5e's default
    # scoped VMEM, and on v7x keep per-tile VMEM under ~48 MiB with grid >= 2 tiles (megacore).
    if B > batch_tile:
        assert batch_tile % 128 == 0
        TB = batch_tile
    else:
        TB = _round_up(B, 16)
    B_pad = _round_up(B, TB)
    grid = (B_pad // TB,)

    # TODO(synk): when B % TB != 0 this pad copies the inputs once through HBM before the kernel;
    # for serving, pick batch_tile so it divides the batch (or mask the ragged tile in-kernel).
    def pad_b(x):
        return x if B_pad == B else jnp.pad(x, ((0, B_pad - B), (0, 0)))

    seq2 = sequence_emb.reshape(B, TA)               # lane-dense (T*A) sequence layout (free)
    tgt_tiled = jnp.tile(target_emb, (1, T))         # target repeated per timestep

    static_bf = pad_b(static_emb.astype(bf16))
    seq_bf = pad_b(seq2.astype(bf16))
    tgt_bf = pad_b(tgt_tiled.astype(bf16))
    mask_bf = pad_b(mask.astype(bf16))

    data_specs = [
        pl.BlockSpec((TB, Fs), lambda i: (i, 0)),
        pl.BlockSpec((TB, TA), lambda i: (i, 0)),
        pl.BlockSpec((TB, TA), lambda i: (i, 0)),
        pl.BlockSpec((TB, T), lambda i: (i, 0)),
    ]
    # weights/biases: whole array, constant index map -> resident across batch tiles
    weight_specs = [pl.BlockSpec(w.shape, lambda i: (0, 0)) for w in weights]

    out = pl.pallas_call(
        kernel,
        out_shape=jax.ShapeDtypeStruct((B_pad, 1), f32),
        grid=grid,
        in_specs=data_specs + weight_specs,
        out_specs=pl.BlockSpec((TB, 1), lambda i: (i, 0)),
        compiler_params=pltpu.CompilerParams(
            dimension_semantics=("parallel",),
            vmem_limit_bytes=48 * 1024 * 1024,
        ),
    )(static_bf, seq_bf, tgt_bf, mask_bf, *weights)

    return out[:B]                                    # (B, 1)


def huim_forward(inputs, params, *, target_features, sequence_features,
                 user_instant_interest_features, batch_tile=512):
    # --- RepresentationalLayer: embedding lookups (plain-JAX gather glue) ---
    emb = {}
    for name in [*user_instant_interest_features, *target_features]:
        emb[name] = params["emb"][name][inputs[name]]                     # (B, D)
    for name in sequence_features:
        emb[name] = params["emb"][name][inputs[name]]                     # (B, T, D)

    seq_field = sequence_features[0]
    mask = (inputs[seq_field] != 0)                                       # (B, T) bool

    target_emb = jnp.concatenate([emb[f] for f in target_features], axis=-1)       # (B, A)
    sequence_emb = jnp.concatenate([emb[f] for f in sequence_features], axis=-1)   # (B, T, A)
    static_emb = jnp.concatenate(
        [emb[f] for f in [*user_instant_interest_features, *target_features]], axis=-1)  # (B, Fs)

    return huim_fused(static_emb, target_emb, sequence_emb, mask, params,
                      batch_tile=batch_tile)


# ----------------------------------------------------------------------------
# Deterministic parameter construction (mirrors the PyTorch module layout)
# ----------------------------------------------------------------------------
def xavier_normal(key, fan_in, fan_out):
    std = math.sqrt(2.0 / (fan_in + fan_out))
    return (std * jax.random.normal(key, (fan_in, fan_out))).astype(jnp.float32)


def make_params(key, *, D, A, H_att, F, dnn_hidden, gate_hidden, vocabs):
    keys = iter(jax.random.split(key, 64))
    p = {"emb": {}}
    for name, vocab in vocabs.items():
        p["emb"][name] = (0.1 * jax.random.normal(next(keys), (vocab, D))).astype(jnp.float32)

    # TargetAttention MLP: (4A -> H_att) Dice -> (H_att -> 1)
    p["att_w1"] = xavier_normal(next(keys), 4 * A, H_att)
    p["att_b1"] = jnp.zeros((1, H_att), jnp.float32)
    p["att_alpha"] = jnp.zeros((1, H_att), jnp.float32)
    p["att_w2"] = xavier_normal(next(keys), H_att, 1)
    p["att_b2"] = jnp.zeros((1, 1), jnp.float32)
    # Dice BatchNorm running stats (eval mode)
    p["att_dice_gamma"] = jnp.ones((1, H_att), jnp.float32)
    p["att_dice_beta"] = jnp.zeros((1, H_att), jnp.float32)
    p["att_dice_mean"] = jnp.zeros((1, H_att), jnp.float32)
    p["att_dice_var"] = jnp.ones((1, H_att), jnp.float32)

    # HIFN BatchNorm1d (eval-mode running stats)
    p["bn_gamma"] = jnp.ones((1, F), jnp.float32)
    p["bn_beta"] = jnp.zeros((1, F), jnp.float32)
    p["bn_mean"] = jnp.zeros((1, F), jnp.float32)
    p["bn_var"] = jnp.ones((1, F), jnp.float32)

    def mlp_params(prefix, sizes):
        for i, (fi, fo) in enumerate(zip(sizes[:-1], sizes[1:]), start=1):
            p[f"{prefix}_w{i}"] = xavier_normal(next(keys), fi, fo)
            p[f"{prefix}_b{i}"] = jnp.zeros((1, fo), jnp.float32)

    mlp_params("gate", [F, *gate_hidden, F])       # HIFN gate MLP
    mlp_params("mlp", [F, *dnn_hidden, F])         # HIFN main MLP
    mlp_params("dnn", [F, *dnn_hidden, 1])         # final DNN head (sigmoid)
    return p


# ----------------------------------------------------------------------------
if __name__ == "__main__":
    key = jax.random.PRNGKey(0)

    # small shapes (T * A = 128 -> fully lane-dense sequence path)
    B, T, D = 4, 8, 8
    target_features = ["item_id", "cate_id"]
    sequence_features = ["click_history", "cate_history"]
    user_instant_interest_features = ["user_id", "gender"]
    A = D * len(target_features)                         # attention_in_dim = 16
    H_att = 64                                           # attention_hidden_sizes = [64]
    dnn_hidden = [64, 32]
    gate_hidden = [64, 32]
    F = D * (len(user_instant_interest_features) + len(target_features)) + A   # 48

    vocabs = {"user_id": 50, "gender": 3, "item_id": 100, "cate_id": 20,
              "click_history": 100, "cate_history": 20}

    params = make_params(key, D=D, A=A, H_att=H_att, F=F,
                         dnn_hidden=dnn_hidden, gate_hidden=gate_hidden, vocabs=vocabs)

    k1, k2, k3, k4, k5, k6 = jax.random.split(jax.random.PRNGKey(1), 6)
    inputs = {
        "user_id": jax.random.randint(k1, (B,), 1, 50),
        "gender": jax.random.randint(k2, (B,), 0, 3),
        "item_id": jax.random.randint(k3, (B,), 1, 100),
        "cate_id": jax.random.randint(k4, (B,), 1, 20),
        "click_history": jax.random.randint(k5, (B, T), 0, 100),   # 0 = padding
        "cate_history": jax.random.randint(k6, (B, T), 0, 20),
    }

    y_pred = huim_forward(
        inputs, params,
        target_features=target_features,
        sequence_features=sequence_features,
        user_instant_interest_features=user_instant_interest_features,
    )
    y_pred = jax.block_until_ready(y_pred)
    assert y_pred.shape == (B, 1)
    assert bool(jnp.all(jnp.isfinite(y_pred)))
    assert bool(jnp.all((y_pred >= 0) & (y_pred <= 1)))
    print("KERNEL_OK")
</pallas_src>

<mosaic_0001>
module attributes {stable_mosaic.version = 11 : i64} {
  func.func @kernel(%arg0: i32, %arg1: memref<16x32xbf16, #tpu.memory_space<vmem>>, %arg2: memref<16x128xbf16, #tpu.memory_space<vmem>>, %arg3: memref<16x128xbf16, #tpu.memory_space<vmem>>, %arg4: memref<16x8xbf16, #tpu.memory_space<vmem>>, %arg5: memref<384x512xbf16, #tpu.memory_space<vmem>>, %arg6: memref<5x512xf32, #tpu.memory_space<vmem>>, %arg7: memref<512x8xbf16, #tpu.memory_space<vmem>>, %arg8: memref<8x128xf32, #tpu.memory_space<vmem>>, %arg9: memref<128x16xf32, #tpu.memory_space<vmem>>, %arg10: memref<13x128xf32, #tpu.memory_space<vmem>>, %arg11: memref<48x64xbf16, #tpu.memory_space<vmem>>, %arg12: memref<64x32xbf16, #tpu.memory_space<vmem>>, %arg13: memref<32x48xbf16, #tpu.memory_space<vmem>>, %arg14: memref<48x64xbf16, #tpu.memory_space<vmem>>, %arg15: memref<64x32xbf16, #tpu.memory_space<vmem>>, %arg16: memref<32x48xbf16, #tpu.memory_space<vmem>>, %arg17: memref<48x64xbf16, #tpu.memory_space<vmem>>, %arg18: memref<64x32xbf16, #tpu.memory_space<vmem>>, %arg19: memref<16x1xf32, #tpu.memory_space<vmem>>) attributes {dimension_semantics = [#tpu.dimension_semantics<parallel>], iteration_bounds = array<i64: 1>, scalar_prefetch = 0 : i64, scratch_operands = 0 : i64, tpu.core_type = #tpu.core_type<tc>, window_params = [{transform_indices = @transform_0, window_bounds = array<i64: 16, 32>}, {transform_indices = @transform_1, window_bounds = array<i64: 16, 128>}, {transform_indices = @transform_2, window_bounds = array<i64: 16, 128>}, {transform_indices = @transform_3, window_bounds = array<i64: 16, 8>}, {pipeline_mode = #tpu.pipeline_mode<synchronous>, transform_indices = @transform_4, window_bounds = array<i64: 384, 512>}, {pipeline_mode = #tpu.pipeline_mode<synchronous>, transform_indices = @transform_5, window_bounds = array<i64: 5, 512>}, {pipeline_mode = #tpu.pipeline_mode<synchronous>, transform_indices = @transform_6, window_bounds = array<i64: 512, 8>}, {pipeline_mode = #tpu.pipeline_mode<synchronous>, transform_indices = @transform_7, window_bounds = array<i64: 8, 128>}, {pipeline_mode = #tpu.pipeline_mode<synchronous>, transform_indices = @transform_8, window_bounds = array<i64: 128, 16>}, {pipeline_mode = #tpu.pipeline_mode<synchronous>, transform_indices = @transform_9, window_bounds = array<i64: 13, 128>}, {pipeline_mode = #tpu.pipeline_mode<synchronous>, transform_indices = @transform_10, window_bounds = array<i64: 48, 64>}, {pipeline_mode = #tpu.pipeline_mode<synchronous>, transform_indices = @transform_11, window_bounds = array<i64: 64, 32>}, {pipeline_mode = #tpu.pipeline_mode<synchronous>, transform_indices = @transform_12, window_bounds = array<i64: 32, 48>}, {pipeline_mode = #tpu.pipeline_mode<synchronous>, transform_indices = @transform_13, window_bounds = array<i64: 48, 64>}, {pipeline_mode = #tpu.pipeline_mode<synchronous>, transform_indices = @transform_14, window_bounds = array<i64: 64, 32>}, {pipeline_mode = #tpu.pipeline_mode<synchronous>, transform_indices = @transform_15, window_bounds = array<i64: 32, 48>}, {pipeline_mode = #tpu.pipeline_mode<synchronous>, transform_indices = @transform_16, window_bounds = array<i64: 48, 64>}, {pipeline_mode = #tpu.pipeline_mode<synchronous>, transform_indices = @transform_17, window_bounds = array<i64: 64, 32>}, {transform_indices = @transform_18, window_bounds = array<i64: 16, 1>}]} {
    %c0 = arith.constant 0 : index
    %c0_0 = arith.constant 0 : index
    %0 = vector.load %arg2[%c0, %c0_0] : memref<16x128xbf16, #tpu.memory_space<vmem>>, vector<16x128xbf16>
    %c0_1 = arith.constant 0 : index
    %c0_2 = arith.constant 0 : index
    %1 = vector.load %arg3[%c0_1, %c0_2] : memref<16x128xbf16, #tpu.memory_space<vmem>>, vector<16x128xbf16>
    %c0_3 = arith.constant 0 : index
    %c0_4 = arith.constant 0 : index
    %2 = vector.load %arg1[%c0_3, %c0_4] : memref<16x32xbf16, #tpu.memory_space<vmem>>, vector<16x32xbf16>
    %3 = arith.extf %2 : vector<16x32xbf16> to vector<16x32xf32>
    %c0_5 = arith.constant 0 : index
    %c0_6 = arith.constant 0 : index
    %4 = vector.load %arg4[%c0_5, %c0_6] : memref<16x8xbf16, #tpu.memory_space<vmem>>, vector<16x8xbf16>
    %5 = arith.extf %4 : vector<16x8xbf16> to vector<16x8xf32>
    %6 = arith.mulf %0, %1 : vector<16x128xbf16>
    %7 = tpu.concatenate %0, %6, %1 in 1 : vector<16x128xbf16>, vector<16x128xbf16>, vector<16x128xbf16> -> vector<16x384xbf16>
    %c0_7 = arith.constant 0 : index
    %c0_8 = arith.constant 0 : index
    %8 = vector.load %arg5[%c0_7, %c0_8] : memref<384x512xbf16, #tpu.memory_space<vmem>>, vector<384x512xbf16>
    %cst = arith.constant dense<0.000000e+00> : vector<16x512xf32>
    %9 = tpu.matmul %7, %8, %cst {dimension_numbers = #tpu.dot_dimension_numbers<[1], [0], [0], [1], [0, 0, 1, 1], [], []>} : vector<16x384xbf16>, vector<384x512xbf16>, vector<16x512xf32> -> vector<16x512xf32>
    %c0_9 = arith.constant 0 : index
    %c0_10 = arith.constant 0 : index
    %10 = vector.load %arg6[%c0_9, %c0_10] : memref<5x512xf32, #tpu.memory_space<vmem>>, vector<1x512xf32>
    %11 = vector.broadcast %10 : vector<1x512xf32> to vector<16x512xf32>
    %12 = arith.addf %9, %11 : vector<16x512xf32>
    %c3 = arith.constant 3 : index
    %c0_11 = arith.constant 0 : index
    %13 = vector.load %arg6[%c3, %c0_11] : memref<5x512xf32, #tpu.memory_space<vmem>>, vector<1x512xf32>
    %14 = vector.broadcast %13 : vector<1x512xf32> to vector<16x512xf32>
    %15 = arith.mulf %12, %14 : vector<16x512xf32>
    %c4 = arith.constant 4 : index
    %c0_12 = arith.constant 0 : index
    %16 = vector.load %arg6[%c4, %c0_12] : memref<5x512xf32, #tpu.memory_space<vmem>>, vector<1x512xf32>
    %17 = vector.broadcast %16 : vector<1x512xf32> to vector<16x512xf32>
    %18 = arith.addf %15, %17 : vector<16x512xf32>
    %19 = arith.negf %18 : vector<16x512xf32>
    %20 = math.exp %19 : vector<16x512xf32>
    %cst_13 = arith.constant 1.000000e+00 : f32
    %21 = vector.broadcast %cst_13 : f32 to vector<16x512xf32>
    %22 = arith.addf %21, %20 : vector<16x512xf32>
    %23 = arith.divf %21, %22 : vector<16x512xf32>
    %c1 = arith.constant 1 : index
    %c0_14 = arith.constant 0 : index
    %24 = vector.load %arg6[%c1, %c0_14] : memref<5x512xf32, #tpu.memory_space<vmem>>, vector<1x512xf32>
    %c2 = arith.constant 2 : index
    %c0_15 = arith.constant 0 : index
    %25 = vector.load %arg6[%c2, %c0_15] : memref<5x512xf32, #tpu.memory_space<vmem>>, vector<1x512xf32>
    %26 = vector.broadcast %25 : vector<1x512xf32> to vector<16x512xf32>
    %27 = arith.mulf %23, %26 : vector<16x512xf32>
    %28 = vector.broadcast %24 : vector<1x512xf32> to vector<16x512xf32>
    %29 = arith.addf %28, %27 : vector<16x512xf32>
    %30 = arith.mulf %12, %29 : vector<16x512xf32>
    %31 = arith.truncf %30 : vector<16x512xf32> to vector<16x512xbf16>
    %c0_16 = arith.constant 0 : index
    %c0_17 = arith.constant 0 : index
    %32 = vector.load %arg7[%c0_16, %c0_17] : memref<512x8xbf16, #tpu.memory_space<vmem>>, vector<512x8xbf16>
    %cst_18 = arith.constant dense<0.000000e+00> : vector<16x8xf32>
    %33 = tpu.matmul %31, %32, %cst_18 {dimension_numbers = #tpu.dot_dimension_numbers<[1], [0], [0], [1], [0, 0, 1, 1], [], []>} : vector<16x512xbf16>, vector<512x8xbf16>, vector<16x8xf32> -> vector<16x8xf32>
    %c11 = arith.constant 11 : index
    %c0_19 = arith.constant 0 : index
    %34 = vector.load %arg10[%c11, %c0_19] : memref<13x128xf32, #tpu.memory_space<vmem>>, vector<1x8xf32>
    %35 = vector.broadcast %34 : vector<1x8xf32> to vector<16x8xf32>
    %36 = arith.addf %33, %35 : vector<16x8xf32>
    %37 = arith.mulf %36, %5 : vector<16x8xf32>
    %c0_20 = arith.constant 0 : index
    %c0_21 = arith.constant 0 : index
    %38 = vector.load %arg8[%c0_20, %c0_21] : memref<8x128xf32, #tpu.memory_space<vmem>>, vector<8x128xf32>
    %cst_22 = arith.constant dense<0.000000e+00> : vector<16x128xf32>
    %39 = tpu.matmul %37, %38, %cst_22 {dimension_numbers = #tpu.dot_dimension_numbers<[1], [0], [0], [1], [0, 0, 1, 1], [], []>} : vector<16x8xf32>, vector<8x128xf32>, vector<16x128xf32> -> vector<16x128xf32>
    %40 = arith.extf %0 : vector<16x128xbf16> to vector<16x128xf32>
    %41 = arith.mulf %39, %40 : vector<16x128xf32>
    %c0_23 = arith.constant 0 : index
    %c0_24 = arith.constant 0 : index
    %42 = vector.load %arg9[%c0_23, %c0_24] : memref<128x16xf32, #tpu.memory_space<vmem>>, vector<128x16xf32>
    %cst_25 = arith.constant dense<0.000000e+00> : vector<16x16xf32>
    %43 = tpu.matmul %41, %42, %cst_25 {dimension_numbers = #tpu.dot_dimension_numbers<[1], [0], [0], [1], [0, 0, 1, 1], [], []>} : vector<16x128xf32>, vector<128x16xf32>, vector<16x16xf32> -> vector<16x16xf32>
    %44 = tpu.concatenate %3, %43 in 1 : vector<16x32xf32>, vector<16x16xf32> -> vector<16x48xf32>
    %c0_26 = arith.constant 0 : index
    %c0_27 = arith.constant 0 : index
    %45 = vector.load %arg10[%c0_26, %c0_27] : memref<13x128xf32, #tpu.memory_space<vmem>>, vector<1x48xf32>
    %46 = vector.broadcast %45 : vector<1x48xf32> to vector<16x48xf32>
    %47 = arith.mulf %44, %46 : vector<16x48xf32>
    %c1_28 = arith.constant 1 : index
    %c0_29 = arith.constant 0 : index
    %48 = vector.load %arg10[%c1_28, %c0_29] : memref<13x128xf32, #tpu.memory_space<vmem>>, vector<1x48xf32>
    %49 = vector.broadcast %48 : vector<1x48xf32> to vector<16x48xf32>
    %50 = arith.addf %47, %49 : vector<16x48xf32>
    %51 = arith.truncf %50 : vector<16x48xf32> to vector<16x48xbf16>
    %c0_30 = arith.constant 0 : index
    %c0_31 = arith.constant 0 : index
    %52 = vector.load %arg11[%c0_30, %c0_31] : memref<48x64xbf16, #tpu.memory_space<vmem>>, vector<48x64xbf16>
    %cst_32 = arith.constant dense<0.000000e+00> : vector<16x64xf32>
    %53 = tpu.matmul %51, %52, %cst_32 {dimension_numbers = #tpu.dot_dimension_numbers<[1], [0], [0], [1], [0, 0, 1, 1], [], []>} : vector<16x48xbf16>, vector<48x64xbf16>, vector<16x64xf32> -> vector<16x64xf32>
    %c2_33 = arith.constant 2 : index
    %c0_34 = arith.constant 0 : index
    %54 = vector.load %arg10[%c2_33, %c0_34] : memref<13x128xf32, #tpu.memory_space<vmem>>, vector<1x64xf32>
    %55 = vector.broadcast %54 : vector<1x64xf32> to vector<16x64xf32>
    %56 = arith.addf %53, %55 : vector<16x64xf32>
    %cst_35 = arith.constant 0.000000e+00 : f32
    %57 = vector.broadcast %cst_35 : f32 to vector<16x64xf32>
    %58 = arith.maximumf %56, %57 : vector<16x64xf32>
    %59 = arith.truncf %58 : vector<16x64xf32> to vector<16x64xbf16>
    %c0_36 = arith.constant 0 : index
    %c0_37 = arith.constant 0 : index
    %60 = vector.load %arg12[%c0_36, %c0_37] : memref<64x32xbf16, #tpu.memory_space<vmem>>, vector<64x32xbf16>
    %cst_38 = arith.constant dense<0.000000e+00> : vector<16x32xf32>
    %61 = tpu.matmul %59, %60, %cst_38 {dimension_numbers = #tpu.dot_dimension_numbers<[1], [0], [0], [1], [0, 0, 1, 1], [], []>} : vector<16x64xbf16>, vector<64x32xbf16>, vector<16x32xf32> -> vector<16x32xf32>
    %c3_39 = arith.constant 3 : index
    %c0_40 = arith.constant 0 : index
    %62 = vector.load %arg10[%c3_39, %c0_40] : memref<13x128xf32, #tpu.memory_space<vmem>>, vector<1x32xf32>
    %63 = vector.broadcast %62 : vector<1x32xf32> to vector<16x32xf32>
    %64 = arith.addf %61, %63 : vector<16x32xf32>
    %cst_41 = arith.constant 0.000000e+00 : f32
    %65 = vector.broadcast %cst_41 : f32 to vector<16x32xf32>
    %66 = arith.maximumf %64, %65 : vector<16x32xf32>
    %67 = arith.truncf %66 : vector<16x32xf32> to vector<16x32xbf16>
    %c0_42 = arith.constant 0 : index
    %c0_43 = arith.constant 0 : index
    %68 = vector.load %arg13[%c0_42, %c0_43] : memref<32x48xbf16, #tpu.memory_space<vmem>>, vector<32x48xbf16>
    %cst_44 = arith.constant dense<0.000000e+00> : vector<16x48xf32>
    %69 = tpu.matmul %67, %68, %cst_44 {dimension_numbers = #tpu.dot_dimension_numbers<[1], [0], [0], [1], [0, 0, 1, 1], [], []>} : vector<16x32xbf16>, vector<32x48xbf16>, vector<16x48xf32> -> vector<16x48xf32>
    %c4_45 = arith.constant 4 : index
    %c0_46 = arith.constant 0 : index
    %70 = vector.load %arg10[%c4_45, %c0_46] : memref<13x128xf32, #tpu.memory_space<vmem>>, vector<1x48xf32>
    %71 = vector.broadcast %70 : vector<1x48xf32> to vector<16x48xf32>
    %72 = arith.addf %69, %71 : vector<16x48xf32>
    %73 = arith.mulf %72, %44 : vector<16x48xf32>
    %74 = arith.truncf %73 : vector<16x48xf32> to vector<16x48xbf16>
    %c0_47 = arith.constant 0 : index
    %c0_48 = arith.constant 0 : index
    %75 = vector.load %arg14[%c0_47, %c0_48] : memref<48x64xbf16, #tpu.memory_space<vmem>>, vector<48x64xbf16>
    %cst_49 = arith.constant dense<0.000000e+00> : vector<16x64xf32>
    %76 = tpu.matmul %74, %75, %cst_49 {dimension_numbers = #tpu.dot_dimension_numbers<[1], [0], [0], [1], [0, 0, 1, 1], [], []>} : vector<16x48xbf16>, vector<48x64xbf16>, vector<16x64xf32> -> vector<16x64xf32>
    %c5 = arith.constant 5 : index
    %c0_50 = arith.constant 0 : index
    %77 = vector.load %arg10[%c5, %c0_50] : memref<13x128xf32, #tpu.memory_space<vmem>>, vector<1x64xf32>
    %78 = vector.broadcast %77 : vector<1x64xf32> to vector<16x64xf32>
    %79 = arith.addf %76, %78 : vector<16x64xf32>
    %cst_51 = arith.constant 0.000000e+00 : f32
    %80 = vector.broadcast %cst_51 : f32 to vector<16x64xf32>
    %81 = arith.maximumf %79, %80 : vector<16x64xf32>
    %82 = arith.truncf %81 : vector<16x64xf32> to vector<16x64xbf16>
    %c0_52 = arith.constant 0 : index
    %c0_53 = arith.constant 0 : index
    %83 = vector.load %arg15[%c0_52, %c0_53] : memref<64x32xbf16, #tpu.memory_space<vmem>>, vector<64x32xbf16>
    %cst_54 = arith.constant dense<0.000000e+00> : vector<16x32xf32>
    %84 = tpu.matmul %82, %83, %cst_54 {dimension_numbers = #tpu.dot_dimension_numbers<[1], [0], [0], [1], [0, 0, 1, 1], [], []>} : vector<16x64xbf16>, vector<64x32xbf16>, vector<16x32xf32> -> vector<16x32xf32>
    %c6 = arith.constant 6 : index
    %c0_55 = arith.constant 0 : index
    %85 = vector.load %arg10[%c6, %c0_55] : memref<13x128xf32, #tpu.memory_space<vmem>>, vector<1x32xf32>
    %86 = vector.broadcast %85 : vector<1x32xf32> to vector<16x32xf32>
    %87 = arith.addf %84, %86 : vector<16x32xf32>
    %cst_56 = arith.constant 0.000000e+00 : f32
    %88 = vector.broadcast %cst_56 : f32 to vector<16x32xf32>
    %89 = arith.maximumf %87, %88 : vector<16x32xf32>
    %90 = arith.truncf %89 : vector<16x32xf32> to vector<16x32xbf16>
    %c0_57 = arith.constant 0 : index
    %c0_58 = arith.constant 0 : index
    %91 = vector.load %arg16[%c0_57, %c0_58] : memref<32x48xbf16, #tpu.memory_space<vmem>>, vector<32x48xbf16>
    %cst_59 = arith.constant dense<0.000000e+00> : vector<16x48xf32>
    %92 = tpu.matmul %90, %91, %cst_59 {dimension_numbers = #tpu.dot_dimension_numbers<[1], [0], [0], [1], [0, 0, 1, 1], [], []>} : vector<16x32xbf16>, vector<32x48xbf16>, vector<16x48xf32> -> vector<16x48xf32>
    %c7 = arith.constant 7 : index
    %c0_60 = arith.constant 0 : index
    %93 = vector.load %arg10[%c7, %c0_60] : memref<13x128xf32, #tpu.memory_space<vmem>>, vector<1x48xf32>
    %94 = vector.broadcast %93 : vector<1x48xf32> to vector<16x48xf32>
    %95 = arith.addf %92, %94 : vector<16x48xf32>
    %96 = arith.truncf %95 : vector<16x48xf32> to vector<16x48xbf16>
    %c0_61 = arith.constant 0 : index
    %c0_62 = arith.constant 0 : index
    %97 = vector.load %arg17[%c0_61, %c0_62] : memref<48x64xbf16, #tpu.memory_space<vmem>>, vector<48x64xbf16>
    %cst_63 = arith.constant dense<0.000000e+00> : vector<16x64xf32>
    %98 = tpu.matmul %96, %97, %cst_63 {dimension_numbers = #tpu.dot_dimension_numbers<[1], [0], [0], [1], [0, 0, 1, 1], [], []>} : vector<16x48xbf16>, vector<48x64xbf16>, vector<16x64xf32> -> vector<16x64xf32>
    %c8 = arith.constant 8 : index
    %c0_64 = arith.constant 0 : index
    %99 = vector.load %arg10[%c8, %c0_64] : memref<13x128xf32, #tpu.memory_space<vmem>>, vector<1x64xf32>
    %100 = vector.broadcast %99 : vector<1x64xf32> to vector<16x64xf32>
    %101 = arith.addf %98, %100 : vector<16x64xf32>
    %cst_65 = arith.constant 0.000000e+00 : f32
    %102 = vector.broadcast %cst_65 : f32 to vector<16x64xf32>
    %103 = arith.maximumf %101, %102 : vector<16x64xf32>
    %104 = arith.truncf %103 : vector<16x64xf32> to vector<16x64xbf16>
    %c0_66 = arith.constant 0 : index
    %c0_67 = arith.constant 0 : index
    %105 = vector.load %arg18[%c0_66, %c0_67] : memref<64x32xbf16, #tpu.memory_space<vmem>>, vector<64x32xbf16>
    %cst_68 = arith.constant dense<0.000000e+00> : vector<16x32xf32>
    %106 = tpu.matmul %104, %105, %cst_68 {dimension_numbers = #tpu.dot_dimension_numbers<[1], [0], [0], [1], [0, 0, 1, 1], [], []>} : vector<16x64xbf16>, vector<64x32xbf16>, vector<16x32xf32> -> vector<16x32xf32>
    %c9 = arith.constant 9 : index
    %c0_69 = arith.constant 0 : index
    %107 = vector.load %arg10[%c9, %c0_69] : memref<13x128xf32, #tpu.memory_space<vmem>>, vector<1x32xf32>
    %108 = vector.broadcast %107 : vector<1x32xf32> to vector<16x32xf32>
    %109 = arith.addf %106, %108 : vector<16x32xf32>
    %cst_70 = arith.constant 0.000000e+00 : f32
    %110 = vector.broadcast %cst_70 : f32 to vector<16x32xf32>
    %111 = arith.maximumf %109, %110 : vector<16x32xf32>
    %c10 = arith.constant 10 : index
    %c0_71 = arith.constant 0 : index
    %112 = vector.load %arg10[%c10, %c0_71] : memref<13x128xf32, #tpu.memory_space<vmem>>, vector<1x32xf32>
    %113 = vector.broadcast %112 : vector<1x32xf32> to vector<16x32xf32>
    %114 = arith.mulf %111, %113 : vector<16x32xf32>
    %cst_72 = arith.constant dense<0.000000e+00> : vector<16xf32>
    %115 = vector.multi_reduction <add>, %114, %cst_72 [1] : vector<16x32xf32> to vector<16xf32>
    %116 = vector.shape_cast %115 : vector<16xf32> to vector<16x1xf32>
    %c12 = arith.constant 12 : index
    %c0_73 = arith.constant 0 : index
    %117 = vector.load %arg10[%c12, %c0_73] : memref<13x128xf32, #tpu.memory_space<vmem>>, vector<1x1xf32>
    %118 = vector.broadcast %117 : vector<1x1xf32> to vector<16x1xf32>
    %119 = arith.addf %116, %118 : vector<16x1xf32>
    %120 = arith.negf %119 : vector<16x1xf32>
    %121 = math.exp %120 : vector<16x1xf32>
    %cst_74 = arith.constant 1.000000e+00 : f32
    %122 = vector.broadcast %cst_74 : f32 to vector<16x1xf32>
    %123 = arith.addf %122, %121 : vector<16x1xf32>
    %124 = arith.divf %122, %123 : vector<16x1xf32>
    %c0_75 = arith.constant 0 : index
    %c0_76 = arith.constant 0 : index
    %125 = vector.load %arg19[%c0_75, %c0_76] : memref<16x1xf32, #tpu.memory_space<vmem>>, vector<16x1xf32>
    tpu.vector_store %arg19[%c0_75, %c0_76], %124 {strides = array<i32>} : memref<16x1xf32, #tpu.memory_space<vmem>>, vector<16x1xf32>,
    return
  }
  func.func @transform_0(%arg0: i32) -> (i32, i32) {
    %c0_i32 = arith.constant 0 : i32
    %c0_i32_0 = arith.constant 0 : i32
    return %arg0, %c0_i32 : i32, i32
  }
  func.func @transform_1(%arg0: i32) -> (i32, i32) {
    %c0_i32 = arith.constant 0 : i32
    %c0_i32_0 = arith.constant 0 : i32
    return %arg0, %c0_i32 : i32, i32
  }
  func.func @transform_2(%arg0: i32) -> (i32, i32) {
    %c0_i32 = arith.constant 0 : i32
    %c0_i32_0 = arith.constant 0 : i32
    return %arg0, %c0_i32 : i32, i32
  }
  func.func @transform_3(%arg0: i32) -> (i32, i32) {
    %c0_i32 = arith.constant 0 : i32
    %c0_i32_0 = arith.constant 0 : i32
    return %arg0, %c0_i32 : i32, i32
  }
  func.func @transform_4(%arg0: i32) -> (i32, i32) {
    %c0_i32 = arith.constant 0 : i32
    %c0_i32_0 = arith.constant 0 : i32
    %c0_i32_1 = arith.constant 0 : i32
    return %c0_i32, %c0_i32_0 : i32, i32
  }
  func.func @transform_5(%arg0: i32) -> (i32, i32) {
    %c0_i32 = arith.constant 0 : i32
    %c0_i32_0 = arith.constant 0 : i32
    %c0_i32_1 = arith.constant 0 : i32
    return %c0_i32, %c0_i32_0 : i32, i32
  }
  func.func @transform_6(%arg0: i32) -> (i32, i32) {
    %c0_i32 = arith.constant 0 : i32
    %c0_i32_0 = arith.constant 0 : i32
    %c0_i32_1 = arith.constant 0 : i32
    return %c0_i32, %c0_i32_0 : i32, i32
  }
  func.func @transform_7(%arg0: i32) -> (i32, i32) {
    %c0_i32 = arith.constant 0 : i32
    %c0_i32_0 = arith.constant 0 : i32
    %c0_i32_1 = arith.constant 0 : i32
    return %c0_i32, %c0_i32_0 : i32, i32
  }
  func.func @transform_8(%arg0: i32) -> (i32, i32) {
    %c0_i32 = arith.constant 0 : i32
    %c0_i32_0 = arith.constant 0 : i32
    %c0_i32_1 = arith.constant 0 : i32
    return %c0_i32, %c0_i32_0 : i32, i32
  }
  func.func @transform_9(%arg0: i32) -> (i32, i32) {
    %c0_i32 = arith.constant 0 : i32
    %c0_i32_0 = arith.constant 0 : i32
    %c0_i32_1 = arith.constant 0 : i32
    return %c0_i32, %c0_i32_0 : i32, i32
  }
  func.func @transform_10(%arg0: i32) -> (i32, i32) {
    %c0_i32 = arith.constant 0 : i32
    %c0_i32_0 = arith.constant 0 : i32
    %c0_i32_1 = arith.constant 0 : i32
    return %c0_i32, %c0_i32_0 : i32, i32
  }
  func.func @transform_11(%arg0: i32) -> (i32, i32) {
    %c0_i32 = arith.constant 0 : i32
    %c0_i32_0 = arith.constant 0 : i32
    %c0_i32_1 = arith.constant 0 : i32
    return %c0_i32, %c0_i32_0 : i32, i32
  }
  func.func @transform_12(%arg0: i32) -> (i32, i32) {
    %c0_i32 = arith.constant 0 : i32
    %c0_i32_0 = arith.constant 0 : i32
    %c0_i32_1 = arith.constant 0 : i32
    return %c0_i32, %c0_i32_0 : i32, i32
  }
  func.func @transform_13(%arg0: i32) -> (i32, i32) {
    %c0_i32 = arith.constant 0 : i32
    %c0_i32_0 = arith.constant 0 : i32
    %c0_i32_1 = arith.constant 0 : i32
    return %c0_i32, %c0_i32_0 : i32, i32
  }
  func.func @transform_14(%arg0: i32) -> (i32, i32) {
    %c0_i32 = arith.constant 0 : i32
    %c0_i32_0 = arith.constant 0 : i32
    %c0_i32_1 = arith.constant 0 : i32
    return %c0_i32, %c0_i32_0 : i32, i32
  }
  func.func @transform_15(%arg0: i32) -> (i32, i32) {
    %c0_i32 = arith.constant 0 : i32
    %c0_i32_0 = arith.constant 0 : i32
    %c0_i32_1 = arith.constant 0 : i32
    return %c0_i32, %c0_i32_0 : i32, i32
  }
  func.func @transform_16(%arg0: i32) -> (i32, i32) {
    %c0_i32 = arith.constant 0 : i32
    %c0_i32_0 = arith.constant 0 : i32
    %c0_i32_1 = arith.constant 0 : i32
    return %c0_i32, %c0_i32_0 : i32, i32
  }
  func.func @transform_17(%arg0: i32) -> (i32, i32) {
    %c0_i32 = arith.constant 0 : i32
    %c0_i32_0 = arith.constant 0 : i32
    %c0_i32_1 = arith.constant 0 : i32
    return %c0_i32, %c0_i32_0 : i32, i32
  }
  func.func @transform_18(%arg0: i32) -> (i32, i32) {
    %c0_i32 = arith.constant 0 : i32
    %c0_i32_0 = arith.constant 0 : i32
    return %arg0, %c0_i32 : i32, i32
  }
}

</mosaic_0001>

<llo_original>
// kernel: tpu_custom_call.1
$region0: #{tpu_custom_call.1}
  #allocation0 [shape = 'u32[]', space=smem, size = 0x4, offset = 0x4, fixed_abs, tag = 'smem constant byte address 0x4 - core index']
  #allocation1 [shape = 'u32[144,128]{1,0:T(1,128)}', space=vmem, size = 0x12000, scoped, tag = 'internal scratch']
  %s0 = inlined_call_operand.vmem [shape: bf16[16,32], index: 0, kind: input, shape index: {}]
  %s1 = inlined_call_operand.vmem [shape: bf16[16,128], index: 1, kind: input, shape index: {}]
  %s2 = inlined_call_operand.vmem [shape: bf16[16,128], index: 2, kind: input, shape index: {}]
  %s3 = inlined_call_operand.vmem [shape: bf16[16,8], index: 3, kind: input, shape index: {}]
  %s4 = inlined_call_operand.hbm [shape: bf16[384,512], index: 4, kind: input, shape index: {}]
  %s5 = inlined_call_operand.vmem [shape: f32[5,512], index: 5, kind: input, shape index: {}]
  %s6 = inlined_call_operand.vmem [shape: bf16[512,8], index: 6, kind: input, shape index: {}]
  %s7 = inlined_call_operand.vmem [shape: f32[8,128], index: 7, kind: input, shape index: {}]
  %s8 = inlined_call_operand.vmem [shape: f32[128,16], index: 8, kind: input, shape index: {}]
  %s9 = inlined_call_operand.vmem [shape: f32[13,128], index: 9, kind: input, shape index: {}]
  %s10 = inlined_call_operand.vmem [shape: bf16[48,64], index: 10, kind: input, shape index: {}]
  %s11 = inlined_call_operand.vmem [shape: bf16[64,32], index: 11, kind: input, shape index: {}]
  %s12 = inlined_call_operand.vmem [shape: bf16[32,48], index: 12, kind: input, shape index: {}]
  %s13 = inlined_call_operand.vmem [shape: bf16[48,64], index: 13, kind: input, shape index: {}]
  %s14 = inlined_call_operand.vmem [shape: bf16[64,32], index: 14, kind: input, shape index: {}]
  %s15 = inlined_call_operand.vmem [shape: bf16[32,48], index: 15, kind: input, shape index: {}]
  %s16 = inlined_call_operand.vmem [shape: bf16[48,64], index: 16, kind: input, shape index: {}]
  %s17 = inlined_call_operand.vmem [shape: bf16[64,32], index: 17, kind: input, shape index: {}]
  %s18 = inlined_call_operand.vmem [shape: f32[16,1], index: 18, kind: output, shape index: {}]
  %s19 = sld [smem:[#allocation0]]
  $region86: #{tpu_custom_call.1} parent=0
    _
  %s21 = ssub.s32 1, %s19
  %s22 = scalar_select 0, %s21, %s19
  $region1: #{tpu_custom_call.1} parent=0
    #allocation2 [shape = 'u8[393216]{0}', space=vmem, size = 0x60000, scoped, tag = 'input window, operand 4, single buffered']
    #allocation3 [shape = 's32[1]{0}', space=sflag, size = 0x4, scoped, tag = 'scoped memory for tpu_custom_call.1']
    %23 = vsyncpa [#allocation3], 0
    // Predicated region
    $region2: #{tpu_custom_call.1} parent=1 // pred_check
      _
    $region3: #{tpu_custom_call.1} parent=1 // pred_check_branch
      %25 = sbr.rel (0) target = $region5
    $region4: #{tpu_custom_call.1} parent=1 // pred_region
      _
    $region5: #{tpu_custom_call.1} parent=1 // pred_fallthru
      _
    // Predicated region
    $region6: #{tpu_custom_call.1} parent=1 // pred_check
      _
    $region7: #{tpu_custom_call.1} parent=1 // pred_check_branch
      %27 = sbr.rel (0) target = $region9
    $region8: #{tpu_custom_call.1} parent=1 // pred_region
      _
    $region9: #{tpu_custom_call.1} parent=1 // pred_fallthru
      _
    // Predicated region
    $region10: #{tpu_custom_call.1} parent=1 // pred_check
      _
    $region11: #{tpu_custom_call.1} parent=1 // pred_check_branch
      %29 = sbr.rel (0) target = $region13
    $region12: #{tpu_custom_call.1} parent=1 // pred_region
      _
    $region13: #{tpu_custom_call.1} parent=1 // pred_fallthru
      _
    // Predicated region
    $region14: #{tpu_custom_call.1} parent=1 // pred_check
      _
    $region15: #{tpu_custom_call.1} parent=1 // pred_check_branch
      %31 = sbr.rel (0) target = $region17
    $region16: #{tpu_custom_call.1} parent=1 // pred_region
      _
    $region17: #{tpu_custom_call.1} parent=1 // pred_fallthru
      _
    // Predicated region
    $region18: #{tpu_custom_call.1} parent=1 // pred_check
      _
    $region19: #{tpu_custom_call.1} parent=1 // pred_check_branch
      %33 = sbr.rel (0) target = $region21
    $region20: #{tpu_custom_call.1} parent=1 // pred_region
      %s35 = ssub.s32 12288, 12288
      %36 = vsyncadd [#allocation3], %s35
      %s37 = sshll.u32 [#allocation2], 4
      %s38 = int_to_ptr.vmem [resolvable:$true] %s37
      %43 = dma.hbm_to_vmem [thread:$0]  %s4, 12288, %s38, [#allocation3], 256, 256, 16
    $region21: #{tpu_custom_call.1} parent=1 // pred_fallthru
      _
    // Predicated region
    $region22: #{tpu_custom_call.1} parent=1 // pred_check
      _
    $region23: #{tpu_custom_call.1} parent=1 // pred_check_branch
      %45 = sbr.rel (0) target = $region25
    $region24: #{tpu_custom_call.1} parent=1 // pred_region
      _
    $region25: #{tpu_custom_call.1} parent=1 // pred_fallthru
      _
    // Predicated region
    $region26: #{tpu_custom_call.1} parent=1 // pred_check
      _
    $region27: #{tpu_custom_call.1} parent=1 // pred_check_branch
      %47 = sbr.rel (0) target = $region29
    $region28: #{tpu_custom_call.1} parent=1 // pred_region
      _
    $region29: #{tpu_custom_call.1} parent=1 // pred_fallthru
      _
    // Predicated region
    $region30: #{tpu_custom_call.1} parent=1 // pred_check
      _
    $region31: #{tpu_custom_call.1} parent=1 // pred_check_branch
      %49 = sbr.rel (0) target = $region33
    $region32: #{tpu_custom_call.1} parent=1 // pred_region
      _
    $region33: #{tpu_custom_call.1} parent=1 // pred_fallthru
      _
    // Predicated region
    $region34: #{tpu_custom_call.1} parent=1 // pred_check
      _
    $region35: #{tpu_custom_call.1} parent=1 // pred_check_branch
      %51 = sbr.rel (0) target = $region37
    $region36: #{tpu_custom_call.1} parent=1 // pred_region
      _
    $region37: #{tpu_custom_call.1} parent=1 // pred_fallthru
      _
    // Predicated region
    $region38: #{tpu_custom_call.1} parent=1 // pred_check
      _
    $region39: #{tpu_custom_call.1} parent=1 // pred_check_branch
      %53 = sbr.rel (0) target = $region41
    $region40: #{tpu_custom_call.1} parent=1 // pred_region
      _
    $region41: #{tpu_custom_call.1} parent=1 // pred_fallthru
      _
    // Predicated region
    $region42: #{tpu_custom_call.1} parent=1 // pred_check
      _
    $region43: #{tpu_custom_call.1} parent=1 // pred_check_branch
      %55 = sbr.rel (0) target = $region45
    $region44: #{tpu_custom_call.1} parent=1 // pred_region
      _
    $region45: #{tpu_custom_call.1} parent=1 // pred_fallthru
      _
    // Predicated region
    $region46: #{tpu_custom_call.1} parent=1 // pred_check
      _
    $region47: #{tpu_custom_call.1} parent=1 // pred_check_branch
      %57 = sbr.rel (0) target = $region49
    $region48: #{tpu_custom_call.1} parent=1 // pred_region
      _
    $region49: #{tpu_custom_call.1} parent=1 // pred_fallthru
      _
    // Predicated region
    $region50: #{tpu_custom_call.1} parent=1 // pred_check
      _
    $region51: #{tpu_custom_call.1} parent=1 // pred_check_branch
      %59 = sbr.rel (0) target = $region53
    $region52: #{tpu_custom_call.1} parent=1 // pred_region
      _
    $region53: #{tpu_custom_call.1} parent=1 // pred_fallthru
      _
    // Predicated region
    $region54: #{tpu_custom_call.1} parent=1 // pred_check
      _
    $region55: #{tpu_custom_call.1} parent=1 // pred_check_branch
      %61 = sbr.rel (0) target = $region57
    $region56: #{tpu_custom_call.1} parent=1 // pred_region
      _
    $region57: #{tpu_custom_call.1} parent=1 // pred_fallthru
      _
    // Predicated region
    $region58: #{tpu_custom_call.1} parent=1 // pred_check
      _
    $region59: #{tpu_custom_call.1} parent=1 // pred_check_branch
      %63 = sbr.rel (0) target = $region61
    $region60: #{tpu_custom_call.1} parent=1 // pred_region
      _
    $region61: #{tpu_custom_call.1} parent=1 // pred_fallthru
      _
    // Predicated region
    $region62: #{tpu_custom_call.1} parent=1 // pred_check
      _
    $region63: #{tpu_custom_call.1} parent=1 // pred_check_branch
      %65 = sbr.rel (0) target = $region65
    $region64: #{tpu_custom_call.1} parent=1 // pred_region
      _
    $region65: #{tpu_custom_call.1} parent=1 // pred_fallthru
      _
    // Predicated region
    $region66: #{tpu_custom_call.1} parent=1 // pred_check
      _
    $region67: #{tpu_custom_call.1} parent=1 // pred_check_branch
      %67 = sbr.rel (0) target = $region69
    $region68: #{tpu_custom_call.1} parent=1 // pred_region
      _
    $region69: #{tpu_custom_call.1} parent=1 // pred_fallthru
      _
    // Predicated region
    $region70: #{tpu_custom_call.1} parent=1 // pred_check
      _
    $region71: #{tpu_custom_call.1} parent=1 // pred_check_branch
      %69 = sbr.rel (0) target = $region73
    $region72: #{tpu_custom_call.1} parent=1 // pred_region
      _
    $region73: #{tpu_custom_call.1} parent=1 // pred_fallthru
      _
    // Predicated region
    $region74: #{tpu_custom_call.1} parent=1 // pred_check
      _
    $region75: #{tpu_custom_call.1} parent=1 // pred_check_branch
      %71 = sbr.rel (0) target = $region77
    $region76: #{tpu_custom_call.1} parent=1 // pred_region
      %72 = dma.done [#allocation3], 12288
    $region77: #{tpu_custom_call.1} parent=1 // pred_fallthru
      _
    %v74 = vld [vmem:[%s1] sm:$0xf]
    %v75 = vld [vmem:[%s1 + $0x4] sm:$0xf]
    %v76 = vld [vmem:[%s2] sm:$0xf]
    %v77 = vld [vmem:[%s2 + $0x4] sm:$0xf]
    %v78 = vld [vmem:[%s0] sm:$0xf]
    %v79 = vld [vmem:[%s0 + $0x4] sm:$0xf]
    %v80 = vunpack.c.l.bf16 %v78
    %v81 = vunpack.c.l.bf16 %v79
    %v82 = vld [vmem:[%s3] sm:$0xf]
    %v83 = vld [vmem:[%s3 + $0x4] sm:$0xf]
    %v84 = vunpack.c.l.bf16 %v82
    %v85 = vunpack.c.l.bf16 %v83
    %v86 = vmul.bf16 %v74, %v76
    %v87 = vmul.bf16 %v75, %v77
    %v90 = vunpack.c.l.b16 %v74
    %v91 = vunpack.c.l.b16 %v75
    %v92 = vpack.c.b16 %v91, %v90
    %v96 = vunpack.c.l.b16 %v86
    %v97 = vunpack.c.l.b16 %v87
    %v98 = vpack.c.b16 %v97, %v96
    %v102 = vunpack.c.l.b16 %v76
    %v103 = vunpack.c.l.b16 %v77
    %v104 = vpack.c.b16 %v103, %v102
    %v106 = vld [vmem:[#allocation2] sm:$0xff]
    %v107 = vld [vmem:[#allocation2 + $0x8] sm:$0xff]
    %v108 = vld [vmem:[#allocation2 + $0x10] sm:$0xff]
    %v109 = vld [vmem:[#allocation2 + $0x18] sm:$0xff]
    %v110 = vld [vmem:[#allocation2 + $0x20] sm:$0xff]
    %v111 = vld [vmem:[#allocation2 + $0x28] sm:$0xff]
    %v112 = vld [vmem:[#allocation2 + $0x30] sm:$0xff]
    %v113 = vld [vmem:[#allocation2 + $0x38] sm:$0xff]
    %v114 = vld [vmem:[#allocation2 + $0x40] sm:$0xff]
    %v115 = vld [vmem:[#allocation2 + $0x48] sm:$0xff]
    %v116 = vld [vmem:[#allocation2 + $0x50] sm:$0xff]
    %v117 = vld [vmem:[#allocation2 + $0x58] sm:$0xff]
    %v118 = vld [vmem:[#allocation2 + $0x60] sm:$0xff]
    %v119 = vld [vmem:[#allocation2 + $0x68] sm:$0xff]
    %v120 = vld [vmem:[#allocation2 + $0x70] sm:$0xff]
    %v121 = vld [vmem:[#allocation2 + $0x78] sm:$0xff]
    %v122 = vld [vmem:[#allocation2 + $0x80] sm:$0xff]
    %v123 = vld [vmem:[#allocation2 + $0x88] sm:$0xff]
    %v124 = vld [vmem:[#allocation2 + $0x90] sm:$0xff]
    %v125 = vld [vmem:[#allocation2 + $0x98] sm:$0xff]
    %v126 = vld [vmem:[#allocation2 + $0xa0] sm:$0xff]
    %v127 = vld [vmem:[#allocation2 + $0xa8] sm:$0xff]
    %v128 = vld [vmem:[#allocation2 + $0xb0] sm:$0xff]
    %v129 = vld [vmem:[#allocation2 + $0xb8] sm:$0xff]
    %v130 = vld [vmem:[#allocation2 + $0xc0] sm:$0xff]
    %v131 = vld [vmem:[#allocation2 + $0xc8] sm:$0xff]
    %v132 = vld [vmem:[#allocation2 + $0xd0] sm:$0xff]
    %v133 = vld [vmem:[#allocation2 + $0xd8] sm:$0xff]
    %v134 = vld [vmem:[#allocation2 + $0xe0] sm:$0xff]
    %v135 = vld [vmem:[#allocation2 + $0xe8] sm:$0xff]
    %v136 = vld [vmem:[#allocation2 + $0xf0] sm:$0xff]
    %v137 = vld [vmem:[#allocation2 + $0xf8] sm:$0xff]
    %v138 = vld [vmem:[#allocation2 + $0x100] sm:$0xff]
    %v139 = vld [vmem:[#allocation2 + $0x108] sm:$0xff]
    %v140 = vld [vmem:[#allocation2 + $0x110] sm:$0xff]
    %v141 = vld [vmem:[#allocation2 + $0x118] sm:$0xff]
    %v142 = vld [vmem:[#allocation2 + $0x120] sm:$0xff]
    %v143 = vld [vmem:[#allocation2 + $0x128] sm:$0xff]
    %v144 = vld [vmem:[#allocation2 + $0x130] sm:$0xff]
    %v145 = vld [vmem:[#allocation2 + $0x138] sm:$0xff]
    %v146 = vld [vmem:[#allocation2 + $0x140] sm:$0xff]
    %v147 = vld [vmem:[#allocation2 + $0x148] sm:$0xff]
    %v148 = vld [vmem:[#allocation2 + $0x150] sm:$0xff]
    %v149 = vld [vmem:[#allocation2 + $0x158] sm:$0xff]
    %v150 = vld [vmem:[#allocation2 + $0x160] sm:$0xff]
    %v151 = vld [vmem:[#allocation2 + $0x168] sm:$0xff]
    %v152 = vld [vmem:[#allocation2 + $0x170] sm:$0xff]
    %v153 = vld [vmem:[#allocation2 + $0x178] sm:$0xff]
    %v154 = vld [vmem:[#allocation2 + $0x180] sm:$0xff]
    %v155 = vld [vmem:[#allocation2 + $0x188] sm:$0xff]
    %v156 = vld [vmem:[#allocation2 + $0x190] sm:$0xff]
    %v157 = vld [vmem:[#allocation2 + $0x198] sm:$0xff]
    %v158 = vld [vmem:[#allocation2 + $0x1a0] sm:$0xff]
    %v159 = vld [vmem:[#allocation2 + $0x1a8] sm:$0xff]
    %v160 = vld [vmem:[#allocation2 + $0x1b0] sm:$0xff]
    %v161 = vld [vmem:[#allocation2 + $0x1b8] sm:$0xff]
    %v162 = vld [vmem:[#allocation2 + $0x1c0] sm:$0xff]
    %v163 = vld [vmem:[#allocation2 + $0x1c8] sm:$0xff]
    %v164 = vld [vmem:[#allocation2 + $0x1d0] sm:$0xff]
    %v165 = vld [vmem:[#allocation2 + $0x1d8] sm:$0xff]
    %v166 = vld [vmem:[#allocation2 + $0x1e0] sm:$0xff]
    %v167 = vld [vmem:[#allocation2 + $0x1e8] sm:$0xff]
    %v168 = vld [vmem:[#allocation2 + $0x1f0] sm:$0xff]
    %v169 = vld [vmem:[#allocation2 + $0x1f8] sm:$0xff]
    %v170 = vld [vmem:[#allocation2 + $0x200] sm:$0xff]
    %v171 = vld [vmem:[#allocation2 + $0x208] sm:$0xff]
    %v172 = vld [vmem:[#allocation2 + $0x210] sm:$0xff]
    %v173 = vld [vmem:[#allocation2 + $0x218] sm:$0xff]
    %v174 = vld [vmem:[#allocation2 + $0x220] sm:$0xff]
    %v175 = vld [vmem:[#allocation2 + $0x228] sm:$0xff]
    %v176 = vld [vmem:[#allocation2 + $0x230] sm:$0xff]
    %v177 = vld [vmem:[#allocation2 + $0x238] sm:$0xff]
    %v178 = vld [vmem:[#allocation2 + $0x240] sm:$0xff]
    %v179 = vld [vmem:[#allocation2 + $0x248] sm:$0xff]
    %v180 = vld [vmem:[#allocation2 + $0x250] sm:$0xff]
    %v181 = vld [vmem:[#allocation2 + $0x258] sm:$0xff]
    %v182 = vld [vmem:[#allocation2 + $0x260] sm:$0xff]
    %v183 = vld [vmem:[#allocation2 + $0x268] sm:$0xff]
    %v184 = vld [vmem:[#allocation2 + $0x270] sm:$0xff]
    %v185 = vld [vmem:[#allocation2 + $0x278] sm:$0xff]
    %v186 = vld [vmem:[#allocation2 + $0x280] sm:$0xff]
    %v187 = vld [vmem:[#allocation2 + $0x288] sm:$0xff]
    %v188 = vld [vmem:[#allocation2 + $0x290] sm:$0xff]
    %v189 = vld [vmem:[#allocation2 + $0x298] sm:$0xff]
    %v190 = vld [vmem:[#allocation2 + $0x2a0] sm:$0xff]
    %v191 = vld [vmem:[#allocation2 + $0x2a8] sm:$0xff]
    %v192 = vld [vmem:[#allocation2 + $0x2b0] sm:$0xff]
    %v193 = vld [vmem:[#allocation2 + $0x2b8] sm:$0xff]
    %v194 = vld [vmem:[#allocation2 + $0x2c0] sm:$0xff]
    %v195 = vld [vmem:[#allocation2 + $0x2c8] sm:$0xff]
    %v196 = vld [vmem:[#allocation2 + $0x2d0] sm:$0xff]
    %v197 = vld [vmem:[#allocation2 + $0x2d8] sm:$0xff]
    %v198 = vld [vmem:[#allocation2 + $0x2e0] sm:$0xff]
    %v199 = vld [vmem:[#allocation2 + $0x2e8] sm:$0xff]
    %v200 = vld [vmem:[#allocation2 + $0x2f0] sm:$0xff]
    %v201 = vld [vmem:[#allocation2 + $0x2f8] sm:$0xff]
    %v202 = vld [vmem:[%s5] ss:$8 sm:$0xf]
    %v204 = vlaneseq
    %v205 = vshrl.u32 %v204, 7
    %v206 = vsub.s32 0, %v205
    %v207 = vrot.slane %v202, %v206
    %v208 = vlaneseq
    %v209 = vshrl.u32 %v208, 7
    %v210 = vsub.s32 1, %v209
    %v211 = vrot.slane %v202, %v210
    %v212 = vlaneseq
    %v213 = vshrl.u32 %v212, 7
    %v214 = vsub.s32 2, %v213
    %v215 = vrot.slane %v202, %v214
    %v216 = vlaneseq
    %v217 = vshrl.u32 %v216, 7
    %v218 = vsub.s32 3, %v217
    %v219 = vrot.slane %v202, %v218
    %v320 = vunpack.c.l.b16 %v106
    %v321 = vunpack.c.h.b16 %v106
    %v322 = vunpack.c.l.b16 %v107
    %v323 = vunpack.c.h.b16 %v107
    %v324 = vunpack.c.l.b16 %v108
    %v325 = vunpack.c.h.b16 %v108
    %v326 = vunpack.c.l.b16 %v109
    %v327 = vunpack.c.h.b16 %v109
    %v328 = vunpack.c.l.b16 %v110
    %v329 = vunpack.c.h.b16 %v110
    %v330 = vunpack.c.l.b16 %v111
    %v331 = vunpack.c.h.b16 %v111
    %v332 = vunpack.c.l.b16 %v112
    %v333 = vunpack.c.h.b16 %v112
    %v334 = vunpack.c.l.b16 %v113
    %v335 = vunpack.c.h.b16 %v113
    %v336 = vunpack.c.l.b16 %v114
    %v337 = vunpack.c.h.b16 %v114
    %v338 = vunpack.c.l.b16 %v115
    %v339 = vunpack.c.h.b16 %v115
    %v340 = vunpack.c.l.b16 %v116
    %v341 = vunpack.c.h.b16 %v116
    %v342 = vunpack.c.l.b16 %v117
    %v343 = vunpack.c.h.b16 %v117
    %v344 = vunpack.c.l.b16 %v118
    %v345 = vunpack.c.h.b16 %v118
    %v346 = vunpack.c.l.b16 %v119
    %v347 = vunpack.c.h.b16 %v119
    %v348 = vunpack.c.l.b16 %v120
    %v349 = vunpack.c.h.b16 %v120
    %v350 = vunpack.c.l.b16 %v121
    %v351 = vunpack.c.h.b16 %v121
    %v352 = vunpack.c.l.b16 %v122
    %v353 = vunpack.c.h.b16 %v122
    %v354 = vunpack.c.l.b16 %v123
    %v355 = vunpack.c.h.b16 %v123
    %v356 = vunpack.c.l.b16 %v124
    %v357 = vunpack.c.h.b16 %v124
    %v358 = vunpack.c.l.b16 %v125
    %v359 = vunpack.c.h.b16 %v125
    %v360 = vunpack.c.l.b16 %v126
    %v361 = vunpack.c.h.b16 %v126
    %v362 = vunpack.c.l.b16 %v127
    %v363 = vunpack.c.h.b16 %v127
    %v364 = vunpack.c.l.b16 %v128
    %v365 = vunpack.c.h.b16 %v128
    %v366 = vunpack.c.l.b16 %v129
    %v367 = vunpack.c.h.b16 %v129
    %v368 = vunpack.c.l.b16 %v130
    %v369 = vunpack.c.h.b16 %v130
    %v370 = vunpack.c.l.b16 %v131
    %v371 = vunpack.c.h.b16 %v131
    %v372 = vunpack.c.l.b16 %v132
    %v373 = vunpack.c.h.b16 %v132
    %v374 = vunpack.c.l.b16 %v133
    %v375 = vunpack.c.h.b16 %v133
    %v376 = vunpack.c.l.b16 %v134
    %v377 = vunpack.c.h.b16 %v134
    %v378 = vunpack.c.l.b16 %v135
    %v379 = vunpack.c.h.b16 %v135
    %v380 = vunpack.c.l.b16 %v136
    %v381 = vunpack.c.h.b16 %v136
    %v382 = vunpack.c.l.b16 %v137
    %v383 = vunpack.c.h.b16 %v137
    %v384 = vunpack.c.l.b16 %v138
    %v385 = vunpack.c.h.b16 %v138
    %v386 = vunpack.c.l.b16 %v139
    %v387 = vunpack.c.h.b16 %v139
    %v388 = vunpack.c.l.b16 %v140
    %v389 = vunpack.c.h.b16 %v140
    %v390 = vunpack.c.l.b16 %v141
    %v391 = vunpack.c.h.b16 %v141
    %v392 = vunpack.c.l.b16 %v142
    %v393 = vunpack.c.h.b16 %v142
    %v394 = vunpack.c.l.b16 %v143
    %v395 = vunpack.c.h.b16 %v143
    %v396 = vunpack.c.l.b16 %v144
    %v397 = vunpack.c.h.b16 %v144
    %v398 = vunpack.c.l.b16 %v145
    %v399 = vunpack.c.h.b16 %v145
    %v400 = vunpack.c.l.b16 %v146
    %v401 = vunpack.c.h.b16 %v146
    %v402 = vunpack.c.l.b16 %v147
    %v403 = vunpack.c.h.b16 %v147
    %v404 = vunpack.c.l.b16 %v148
    %v405 = vunpack.c.h.b16 %v148
    %v406 = vunpack.c.l.b16 %v149
    %v407 = vunpack.c.h.b16 %v149
    %v408 = vunpack.c.l.b16 %v150
    %v409 = vunpack.c.h.b16 %v150
    %v410 = vunpack.c.l.b16 %v151
    %v411 = vunpack.c.h.b16 %v151
    %v412 = vunpack.c.l.b16 %v152
    %v413 = vunpack.c.h.b16 %v152
    %v414 = vunpack.c.l.b16 %v153
    %v415 = vunpack.c.h.b16 %v153
    %v416 = vunpack.c.l.b16 %v154
    %v417 = vunpack.c.h.b16 %v154
    %v418 = vunpack.c.l.b16 %v155
    %v419 = vunpack.c.h.b16 %v155
    %v420 = vunpack.c.l.b16 %v156
    %v421 = vunpack.c.h.b16 %v156
    %v422 = vunpack.c.l.b16 %v157
    %v423 = vunpack.c.h.b16 %v157
    %v424 = vunpack.c.l.b16 %v158
    %v425 = vunpack.c.h.b16 %v158
    %v426 = vunpack.c.l.b16 %v159
    %v427 = vunpack.c.h.b16 %v159
    %v428 = vunpack.c.l.b16 %v160
    %v429 = vunpack.c.h.b16 %v160
    %v430 = vunpack.c.l.b16 %v161
    %v431 = vunpack.c.h.b16 %v161
    %v432 = vunpack.c.l.b16 %v162
    %v433 = vunpack.c.h.b16 %v162
    %v434 = vunpack.c.l.b16 %v163
    %v435 = vunpack.c.h.b16 %v163
    %v436 = vunpack.c.l.b16 %v164
    %v437 = vunpack.c.h.b16 %v164
    %v438 = vunpack.c.l.b16 %v165
    %v439 = vunpack.c.h.b16 %v165
    %v440 = vunpack.c.l.b16 %v166
    %v441 = vunpack.c.h.b16 %v166
    %v442 = vunpack.c.l.b16 %v167
    %v443 = vunpack.c.h.b16 %v167
    %v444 = vunpack.c.l.b16 %v168
    %v445 = vunpack.c.h.b16 %v168
    %v446 = vunpack.c.l.b16 %v169
    %v447 = vunpack.c.h.b16 %v169
    %v448 = vunpack.c.l.b16 %v170
    %v449 = vunpack.c.h.b16 %v170
    %v450 = vunpack.c.l.b16 %v171
    %v451 = vunpack.c.h.b16 %v171
    %v452 = vunpack.c.l.b16 %v172
    %v453 = vunpack.c.h.b16 %v172
    %v454 = vunpack.c.l.b16 %v173
    %v455 = vunpack.c.h.b16 %v173
    %v456 = vunpack.c.l.b16 %v174
    %v457 = vunpack.c.h.b16 %v174
    %v458 = vunpack.c.l.b16 %v175
    %v459 = vunpack.c.h.b16 %v175
    %v460 = vunpack.c.l.b16 %v176
    %v461 = vunpack.c.h.b16 %v176
    %v462 = vunpack.c.l.b16 %v177
    %v463 = vunpack.c.h.b16 %v177
    %v464 = vunpack.c.l.b16 %v178
    %v465 = vunpack.c.h.b16 %v178
    %v466 = vunpack.c.l.b16 %v179
    %v467 = vunpack.c.h.b16 %v179
    %v468 = vunpack.c.l.b16 %v180
    %v469 = vunpack.c.h.b16 %v180
    %v470 = vunpack.c.l.b16 %v181
    %v471 = vunpack.c.h.b16 %v181
    %v472 = vunpack.c.l.b16 %v182
    %v473 = vunpack.c.h.b16 %v182
    %v474 = vunpack.c.l.b16 %v183
    %v475 = vunpack.c.h.b16 %v183
    %v476 = vunpack.c.l.b16 %v184
    %v477 = vunpack.c.h.b16 %v184
    %v478 = vunpack.c.l.b16 %v185
    %v479 = vunpack.c.h.b16 %v185
    %v480 = vunpack.c.l.b16 %v186
    %v481 = vunpack.c.h.b16 %v186
    %v482 = vunpack.c.l.b16 %v187
    %v483 = vunpack.c.h.b16 %v187
    %v484 = vunpack.c.l.b16 %v188
    %v485 = vunpack.c.h.b16 %v188
    %v486 = vunpack.c.l.b16 %v189
    %v487 = vunpack.c.h.b16 %v189
    %v488 = vunpack.c.l.b16 %v190
    %v489 = vunpack.c.h.b16 %v190
    %v490 = vunpack.c.l.b16 %v191
    %v491 = vunpack.c.h.b16 %v191
    %v492 = vunpack.c.l.b16 %v192
    %v493 = vunpack.c.h.b16 %v192
    %v494 = vunpack.c.l.b16 %v193
    %v495 = vunpack.c.h.b16 %v193
    %v496 = vunpack.c.l.b16 %v194
    %v497 = vunpack.c.h.b16 %v194
    %v498 = vunpack.c.l.b16 %v195
    %v499 = vunpack.c.h.b16 %v195
    %v500 = vunpack.c.l.b16 %v196
    %v501 = vunpack.c.h.b16 %v196
    %v502 = vunpack.c.l.b16 %v197
    %v503 = vunpack.c.h.b16 %v197
    %v504 = vunpack.c.l.b16 %v198
    %v505 = vunpack.c.h.b16 %v198
    %v506 = vunpack.c.l.b16 %v199
    %v507 = vunpack.c.h.b16 %v199
    %v508 = vunpack.c.l.b16 %v200
    %v509 = vunpack.c.h.b16 %v200
    %v510 = vunpack.c.l.b16 %v201
    %v511 = vunpack.c.h.b16 %v201
    %v512 = vpack.c.b16 %v324, %v320
    %v513 = vpack.c.b16 %v325, %v321
    %v514 = vpack.c.b16 %v326, %v322
    %v515 = vpack.c.b16 %v327, %v323
    %v516 = vpack.c.b16 %v332, %v328
    %v517 = vpack.c.b16 %v333, %v329
    %v518 = vpack.c.b16 %v334, %v330
    %v519 = vpack.c.b16 %v335, %v331
    %v520 = vpack.c.b16 %v340, %v336
    %v521 = vpack.c.b16 %v341, %v337
    %v522 = vpack.c.b16 %v342, %v338
    %v523 = vpack.c.b16 %v343, %v339
    %v524 = vpack.c.b16 %v348, %v344
    %v525 = vpack.c.b16 %v349, %v345
    %v526 = vpack.c.b16 %v350, %v346
    %v527 = vpack.c.b16 %v351, %v347
    %v528 = vpack.c.b16 %v356, %v352
    %v529 = vpack.c.b16 %v357, %v353
    %v530 = vpack.c.b16 %v358, %v354
    %v531 = vpack.c.b16 %v359, %v355
    %v532 = vpack.c.b16 %v364, %v360
    %v533 = vpack.c.b16 %v365, %v361
    %v534 = vpack.c.b16 %v366, %v362
    %v535 = vpack.c.b16 %v367, %v363
    %v536 = vpack.c.b16 %v372, %v368
    %v537 = vpack.c.b16 %v373, %v369
    %v538 = vpack.c.b16 %v374, %v370
    %v539 = vpack.c.b16 %v375, %v371
    %v540 = vpack.c.b16 %v380, %v376
    %v541 = vpack.c.b16 %v381, %v377
    %v542 = vpack.c.b16 %v382, %v378
    %v543 = vpack.c.b16 %v383, %v379
    %v544 = vpack.c.b16 %v388, %v384
    %v545 = vpack.c.b16 %v389, %v385
    %v546 = vpack.c.b16 %v390, %v386
    %v547 = vpack.c.b16 %v391, %v387
    %v548 = vpack.c.b16 %v396, %v392
    %v549 = vpack.c.b16 %v397, %v393
    %v550 = vpack.c.b16 %v398, %v394
    %v551 = vpack.c.b16 %v399, %v395
    %v552 = vpack.c.b16 %v404, %v400
    %v553 = vpack.c.b16 %v405, %v401
    %v554 = vpack.c.b16 %v406, %v402
    %v555 = vpack.c.b16 %v407, %v403
    %v556 = vpack.c.b16 %v412, %v408
    %v557 = vpack.c.b16 %v413, %v409
    %v558 = vpack.c.b16 %v414, %v410
    %v559 = vpack.c.b16 %v415, %v411
    %v560 = vpack.c.b16 %v420, %v416
    %v561 = vpack.c.b16 %v421, %v417
    %v562 = vpack.c.b16 %v422, %v418
    %v563 = vpack.c.b16 %v423, %v419
    %v564 = vpack.c.b16 %v428, %v424
    %v565 = vpack.c.b16 %v429, %v425
    %v566 = vpack.c.b16 %v430, %v426
    %v567 = vpack.c.b16 %v431, %v427
    %v568 = vpack.c.b16 %v436, %v432
    %v569 = vpack.c.b16 %v437, %v433
    %v570 = vpack.c.b16 %v438, %v434
    %v571 = vpack.c.b16 %v439, %v435
    %v572 = vpack.c.b16 %v444, %v440
    %v573 = vpack.c.b16 %v445, %v441
    %v574 = vpack.c.b16 %v446, %v442
    %v575 = vpack.c.b16 %v447, %v443
    %v576 = vpack.c.b16 %v452, %v448
    %v577 = vpack.c.b16 %v453, %v449
    %v578 = vpack.c.b16 %v454, %v450
    %v579 = vpack.c.b16 %v455, %v451
    %v580 = vpack.c.b16 %v460, %v456
    %v581 = vpack.c.b16 %v461, %v457
    %v582 = vpack.c.b16 %v462, %v458
    %v583 = vpack.c.b16 %v463, %v459
    %v584 = vpack.c.b16 %v468, %v464
    %v585 = vpack.c.b16 %v469, %v465
    %v586 = vpack.c.b16 %v470, %v466
    %v587 = vpack.c.b16 %v471, %v467
    %v588 = vpack.c.b16 %v476, %v472
    %v589 = vpack.c.b16 %v477, %v473
    %v590 = vpack.c.b16 %v478, %v474
    %v591 = vpack.c.b16 %v479, %v475
    %v592 = vpack.c.b16 %v484, %v480
    %v593 = vpack.c.b16 %v485, %v481
    %v594 = vpack.c.b16 %v486, %v482
    %v595 = vpack.c.b16 %v487, %v483
    %v596 = vpack.c.b16 %v492, %v488
    %v597 = vpack.c.b16 %v493, %v489
    %v598 = vpack.c.b16 %v494, %v490
    %v599 = vpack.c.b16 %v495, %v491
    %v600 = vpack.c.b16 %v500, %v496
    %v601 = vpack.c.b16 %v501, %v497
    %v602 = vpack.c.b16 %v502, %v498
    %v603 = vpack.c.b16 %v503, %v499
    %v604 = vpack.c.b16 %v508, %v504
    %v605 = vpack.c.b16 %v509, %v505
    %v606 = vpack.c.b16 %v510, %v506
    %v607 = vpack.c.b16 %v511, %v507
    %704 = vmatprep.subr.bf16.mxu0 %v513
    %705 = vmatpush1.bf16.msra.mxu0 %v512
    %706 = vmatprep.subr.bf16.mxu0 %v517
    %707 = vmatpush1.bf16.msra.mxu0 %v516
    %708 = vmatprep.subr.bf16.mxu0 %v521
    %709 = vmatpush1.bf16.msra.mxu0 %v520
    %710 = vmatprep.subr.bf16.mxu0 %v525
    %711 = vmatpush1.bf16.msra.mxu0 %v524
    %712 = vmatprep.subr.bf16.mxu0 %v529
    %713 = vmatpush1.bf16.msra.mxu0 %v528
    %714 = vmatprep.subr.bf16.mxu0 %v533
    %715 = vmatpush1.bf16.msra.mxu0 %v532
    %716 = vmatprep.subr.bf16.mxu0 %v537
    %717 = vmatpush1.bf16.msra.mxu0 %v536
    %718 = vmatprep.subr.bf16.mxu0 %v541
    %719 = vmatpush1.bf16.msra.mxu0 %v540
    %720 = vmatprep.subr.bf16.mxu0 %v545
    %721 = vmatpush1.bf16.msra.mxu0 %v544
    %722 = vmatprep.subr.bf16.mxu0 %v549
    %723 = vmatpush1.bf16.msra.mxu0 %v548
    %724 = vmatprep.subr.bf16.mxu0 %v553
    %725 = vmatpush1.bf16.msra.mxu0 %v552
    %726 = vmatprep.subr.bf16.mxu0 %v557
    %727 = vmatpush1.bf16.msra.mxu0 %v556
    %728 = vmatprep.subr.bf16.mxu0 %v561
    %729 = vmatpush1.bf16.msra.mxu0 %v560
    %730 = vmatprep.subr.bf16.mxu0 %v565
    %731 = vmatpush1.bf16.msra.mxu0 %v564
    %732 = vmatprep.subr.bf16.mxu0 %v569
    %733 = vmatpush1.bf16.msra.mxu0 %v568
    %734 = vmatprep.subr.bf16.mxu0 %v573
    %735 = vmatpush1.bf16.msra.mxu0 %v572
    %736 = vmatprep.mubr.bf16.mxu0 %v98
    %737 = vmatmul.mubr.bf16.gmra.mrb[0].mxu0 %v92
    %v738 = vpop.f32.mrb[0].mxu0
    %v739 = vadd.f32 %v207, %v738
    %v740 = vpop.f32.mrb[0].mxu0
    %v741 = vadd.f32 %v211, %v740
    %v742 = vpop.f32.mrb[0].mxu0
    %v743 = vadd.f32 %v207, %v742
    %v744 = vpop.f32.mrb[0].mxu0
    %v745 = vadd.f32 %v211, %v744
    %746 = vdwg.mxu0
    %747 = vmatprep.subr.bf16.mxu0 %v577
    %748 = vmatpush1.bf16.msra.mxu0 %v576
    %749 = vmatprep.subr.bf16.mxu0 %v581
    %750 = vmatpush1.bf16.msra.mxu0 %v580
    %751 = vmatprep.subr.bf16.mxu0 %v585
    %752 = vmatpush1.bf16.msra.mxu0 %v584
    %753 = vmatprep.subr.bf16.mxu0 %v589
    %754 = vmatpush1.bf16.msra.mxu0 %v588
    %755 = vmatprep.subr.bf16.mxu0 %v593
    %756 = vmatpush1.bf16.msra.mxu0 %v592
    %757 = vmatprep.subr.bf16.mxu0 %v597
    %758 = vmatpush1.bf16.msra.mxu0 %v596
    %759 = vmatprep.subr.bf16.mxu0 %v601
    %760 = vmatpush1.bf16.msra.mxu0 %v600
    %761 = vmatprep.subr.bf16.mxu0 %v605
    %762 = vmatpush1.bf16.msra.mxu0 %v604
    %763 = vmatprep.subr.bf16.mxu0 0
    %764 = vmatpush1.bf16.msra.mxu0 0
    %765 = vmatprep.subr.bf16.mxu0 0
    %766 = vmatpush1.bf16.msra.mxu0 0
    %767 = vmatprep.subr.bf16.mxu0 0
    %768 = vmatpush1.bf16.msra.mxu0 0
    %769 = vmatprep.subr.bf16.mxu0 0
    %770 = vmatpush1.bf16.msra.mxu0 0
    %771 = vmatprep.subr.bf16.mxu0 0
    %772 = vmatpush1.bf16.msra.mxu0 0
    %773 = vmatprep.subr.bf16.mxu0 0
    %774 = vmatpush1.bf16.msra.mxu0 0
    %775 = vmatprep.subr.bf16.mxu0 0
    %776 = vmatpush1.bf16.msra.mxu0 0
    %777 = vmatprep.subr.bf16.mxu0 0
    %778 = vmatpush1.bf16.msra.mxu0 0
    %779 = vmatprep.mubr.bf16.mxu0 0
    %780 = vmatmul.mubr.bf16.gmra.mrb[0].mxu0 %v104
    %v781 = vpop.f32.mrb[0].mxu0
    %v782 = vadd.f32 %v739, %v781
    %v783 = vpop.f32.mrb[0].mxu0
    %v784 = vadd.f32 %v741, %v783
    %v785 = vpop.f32.mrb[0].mxu0
    %v786 = vadd.f32 %v743, %v785
    %v787 = vpop.f32.mrb[0].mxu0
    %v788 = vadd.f32 %v745, %v787
    %789 = vdwg.mxu0
    %790 = vmatprep.subr.bf16.mxu0 %v515
    %791 = vmatpush1.bf16.msra.mxu0 %v514
    %792 = vmatprep.subr.bf16.mxu0 %v519
    %793 = vmatpush1.bf16.msra.mxu0 %v518
    %794 = vmatprep.subr.bf16.mxu0 %v523
    %795 = vmatpush1.bf16.msra.mxu0 %v522
    %796 = vmatprep.subr.bf16.mxu0 %v527
    %797 = vmatpush1.bf16.msra.mxu0 %v526
    %798 = vmatprep.subr.bf16.mxu0 %v531
    %799 = vmatpush1.bf16.msra.mxu0 %v530
    %800 = vmatprep.subr.bf16.mxu0 %v535
    %801 = vmatpush1.bf16.msra.mxu0 %v534
    %802 = vmatprep.subr.bf16.mxu0 %v539
    %803 = vmatpush1.bf16.msra.mxu0 %v538
    %804 = vmatprep.subr.bf16.mxu0 %v543
    %805 = vmatpush1.bf16.msra.mxu0 %v542
    %806 = vmatprep.subr.bf16.mxu0 %v547
    %807 = vmatpush1.bf16.msra.mxu0 %v546
    %808 = vmatprep.subr.bf16.mxu0 %v551
    %809 = vmatpush1.bf16.msra.mxu0 %v550
    %810 = vmatprep.subr.bf16.mxu0 %v555
    %811 = vmatpush1.bf16.msra.mxu0 %v554
    %812 = vmatprep.subr.bf16.mxu0 %v559
    %813 = vmatpush1.bf16.msra.mxu0 %v558
    %814 = vmatprep.subr.bf16.mxu0 %v563
    %815 = vmatpush1.bf16.msra.mxu0 %v562
    %816 = vmatprep.subr.bf16.mxu0 %v567
    %817 = vmatpush1.bf16.msra.mxu0 %v566
    %818 = vmatprep.subr.bf16.mxu0 %v571
    %819 = vmatpush1.bf16.msra.mxu0 %v570
    %820 = vmatprep.subr.bf16.mxu0 %v575
    %821 = vmatpush1.bf16.msra.mxu0 %v574
    %822 = vmatprep.mubr.bf16.mxu0 %v98
    %823 = vmatmul.mubr.bf16.gmra.mrb[0].mxu0 %v92
    %v824 = vpop.f32.mrb[0].mxu0
    %v825 = vadd.f32 %v215, %v824
    %v826 = vpop.f32.mrb[0].mxu0
    %v827 = vadd.f32 %v219, %v826
    %v828 = vpop.f32.mrb[0].mxu0
    %v829 = vadd.f32 %v215, %v828
    %v830 = vpop.f32.mrb[0].mxu0
    %v831 = vadd.f32 %v219, %v830
    %832 = vdwg.mxu0
    %833 = vmatprep.subr.bf16.mxu0 %v579
    %834 = vmatpush1.bf16.msra.mxu0 %v578
    %835 = vmatprep.subr.bf16.mxu0 %v583
    %836 = vmatpush1.bf16.msra.mxu0 %v582
    %837 = vmatprep.subr.bf16.mxu0 %v587
    %838 = vmatpush1.bf16.msra.mxu0 %v586
    %839 = vmatprep.subr.bf16.mxu0 %v591
    %840 = vmatpush1.bf16.msra.mxu0 %v590
    %841 = vmatprep.subr.bf16.mxu0 %v595
    %842 = vmatpush1.bf16.msra.mxu0 %v594
    %843 = vmatprep.subr.bf16.mxu0 %v599
    %844 = vmatpush1.bf16.msra.mxu0 %v598
    %845 = vmatprep.subr.bf16.mxu0 %v603
    %846 = vmatpush1.bf16.msra.mxu0 %v602
    %847 = vmatprep.subr.bf16.mxu0 %v607
    %848 = vmatpush1.bf16.msra.mxu0 %v606
    %849 = vmatprep.subr.bf16.mxu0 0
    %850 = vmatpush1.bf16.msra.mxu0 0
    %851 = vmatprep.subr.bf16.mxu0 0
    %852 = vmatpush1.bf16.msra.mxu0 0
    %853 = vmatprep.subr.bf16.mxu0 0
    %854 = vmatpush1.bf16.msra.mxu0 0
    %855 = vmatprep.subr.bf16.mxu0 0
    %856 = vmatpush1.bf16.msra.mxu0 0
    %857 = vmatprep.subr.bf16.mxu0 0
    %858 = vmatpush1.bf16.msra.mxu0 0
    %859 = vmatprep.subr.bf16.mxu0 0
    %860 = vmatpush1.bf16.msra.mxu0 0
    %861 = vmatprep.subr.bf16.mxu0 0
    %862 = vmatpush1.bf16.msra.mxu0 0
    %863 = vmatprep.subr.bf16.mxu0 0
    %864 = vmatpush1.bf16.msra.mxu0 0
    %865 = vmatprep.mubr.bf16.mxu0 0
    %866 = vmatmul.mubr.bf16.gmra.mrb[0].mxu0 %v104
    %v867 = vpop.f32.mrb[0].mxu0
    %v868 = vadd.f32 %v825, %v867
    %v869 = vpop.f32.mrb[0].mxu0
    %v870 = vadd.f32 %v827, %v869
    %v871 = vpop.f32.mrb[0].mxu0
    %v872 = vadd.f32 %v829, %v871
    %v873 = vpop.f32.mrb[0].mxu0
    %v874 = vadd.f32 %v831, %v873
    %875 = vdwg.mxu0
    %s876 = scalar_lea.vmem %s5, 3
    %v877 = vld [vmem:[%s876] ss:$8 sm:$0xf]
    %v879 = vlaneseq
    %v880 = vshrl.u32 %v879, 7
    %v881 = vsub.s32 0, %v880
    %v882 = vrot.slane %v877, %v881
    %v883 = vlaneseq
    %v884 = vshrl.u32 %v883, 7
    %v885 = vsub.s32 1, %v884
    %v886 = vrot.slane %v877, %v885
    %v887 = vlaneseq
    %v888 = vshrl.u32 %v887, 7
    %v889 = vsub.s32 2, %v888
    %v890 = vrot.slane %v877, %v889
    %v891 = vlaneseq
    %v892 = vshrl.u32 %v891, 7
    %v893 = vsub.s32 3, %v892
    %v894 = vrot.slane %v877, %v893
    %v899 = vmul.f32 %v782, %v882
    %v900 = vmul.f32 %v784, %v886
    %v901 = vmul.f32 %v868, %v890
    %v902 = vmul.f32 %v870, %v894
    %v903 = vmul.f32 %v786, %v882
    %v904 = vmul.f32 %v788, %v886
    %v905 = vmul.f32 %v872, %v890
    %v906 = vmul.f32 %v874, %v894
    %s907 = scalar_lea.vmem %s5, 4
    %v908 = vld [vmem:[%s907] ss:$8 sm:$0xf]
    %v910 = vlaneseq
    %v911 = vshrl.u32 %v910, 7
    %v912 = vsub.s32 0, %v911
    %v913 = vrot.slane %v908, %v912
    %v914 = vlaneseq
    %v915 = vshrl.u32 %v914, 7
    %v916 = vsub.s32 1, %v915
    %v917 = vrot.slane %v908, %v916
    %v918 = vlaneseq
    %v919 = vshrl.u32 %v918, 7
    %v920 = vsub.s32 2, %v919
    %v921 = vrot.slane %v908, %v920
    %v922 = vlaneseq
    %v923 = vshrl.u32 %v922, 7
    %v924 = vsub.s32 3, %v923
    %v925 = vrot.slane %v908, %v924
    %v930 = vadd.f32 %v899, %v913
    %v931 = vadd.f32 %v900, %v917
    %v932 = vadd.f32 %v901, %v921
    %v933 = vadd.f32 %v902, %v925
    %v934 = vadd.f32 %v903, %v913
    %v935 = vadd.f32 %v904, %v917
    %v936 = vadd.f32 %v905, %v921
    %v937 = vadd.f32 %v906, %v925
    %v938 = vxor.u32 %v930, 2147483648
    %v939 = vxor.u32 %v931, 2147483648
    %v940 = vxor.u32 %v932, 2147483648
    %v941 = vxor.u32 %v933, 2147483648
    %v942 = vxor.u32 %v934, 2147483648
    %v943 = vxor.u32 %v935, 2147483648
    %v944 = vxor.u32 %v936, 2147483648
    %v945 = vxor.u32 %v937, 2147483648
    %v946 = vmul.f32 %v938, 1.442695
    %v947 = vpow.pop %v946
    %v948 = vmul.f32 %v939, 1.442695
    %v949 = vpow.pop %v948
    %v950 = vmul.f32 %v940, 1.442695
    %v951 = vpow.pop %v950
    %v952 = vmul.f32 %v941, 1.442695
    %v953 = vpow.pop %v952
    %v954 = vmul.f32 %v942, 1.442695
    %v955 = vpow.pop %v954
    %v956 = vmul.f32 %v943, 1.442695
    %v957 = vpow.pop %v956
    %v958 = vmul.f32 %v944, 1.442695
    %v959 = vpow.pop %v958
    %v960 = vmul.f32 %v945, 1.442695
    %v961 = vpow.pop %v960
    %v962 = vadd.f32 %v947, 1.0
    %v963 = vadd.f32 %v949, 1.0
    %v964 = vadd.f32 %v951, 1.0
    %v965 = vadd.f32 %v953, 1.0
    %v966 = vadd.f32 %v955, 1.0
    %v967 = vadd.f32 %v957, 1.0
    %v968 = vadd.f32 %v959, 1.0
    %v969 = vadd.f32 %v961, 1.0
    %v970 = vrcp.pop %v962
    %v971 = vmul.f32 1.0, %v970
    %v972 = vrcp.pop %v963
    %v973 = vmul.f32 1.0, %v972
    %v974 = vrcp.pop %v964
    %v975 = vmul.f32 1.0, %v974
    %v976 = vrcp.pop %v965
    %v977 = vmul.f32 1.0, %v976
    %v978 = vrcp.pop %v966
    %v979 = vmul.f32 1.0, %v978
    %v980 = vrcp.pop %v967
    %v981 = vmul.f32 1.0, %v980
    %v982 = vrcp.pop %v968
    %v983 = vmul.f32 1.0, %v982
    %v984 = vrcp.pop %v969
    %v985 = vmul.f32 1.0, %v984
    %s986 = scalar_lea.vmem %s5, 1
    %v987 = vld [vmem:[%s986] ss:$8 sm:$0xf]
    %s988 = scalar_lea.vmem %s5, 2
    %v989 = vld [vmem:[%s988] ss:$8 sm:$0xf]
    %v991 = vlaneseq
    %v992 = vshrl.u32 %v991, 7
    %v993 = vsub.s32 0, %v992
    %v994 = vrot.slane %v989, %v993
    %v995 = vlaneseq
    %v996 = vshrl.u32 %v995, 7
    %v997 = vsub.s32 1, %v996
    %v998 = vrot.slane %v989, %v997
    %v999 = vlaneseq
    %v1000 = vshrl.u32 %v999, 7
    %v1001 = vsub.s32 2, %v1000
    %v1002 = vrot.slane %v989, %v1001
    %v1003 = vlaneseq
    %v1004 = vshrl.u32 %v1003, 7
    %v1005 = vsub.s32 3, %v1004
    %v1006 = vrot.slane %v989, %v1005
    %v1011 = vmul.f32 %v971, %v994
    %v1012 = vmul.f32 %v973, %v998
    %v1013 = vmul.f32 %v975, %v1002
    %v1014 = vmul.f32 %v977, %v1006
    %v1015 = vmul.f32 %v979, %v994
    %v1016 = vmul.f32 %v981, %v998
    %v1017 = vmul.f32 %v983, %v1002
    %v1018 = vmul.f32 %v985, %v1006
    %v1020 = vlaneseq
    %v1021 = vshrl.u32 %v1020, 7
    %v1022 = vsub.s32 0, %v1021
    %v1023 = vrot.slane %v987, %v1022
    %v1024 = vlaneseq
    %v1025 = vshrl.u32 %v1024, 7
    %v1026 = vsub.s32 1, %v1025
    %v1027 = vrot.slane %v987, %v1026
    %v1028 = vlaneseq
    %v1029 = vshrl.u32 %v1028, 7
    %v1030 = vsub.s32 2, %v1029
    %v1031 = vrot.slane %v987, %v1030
    %v1032 = vlaneseq
    %v1033 = vshrl.u32 %v1032, 7
    %v1034 = vsub.s32 3, %v1033
    %v1035 = vrot.slane %v987, %v1034
    %v1040 = vadd.f32 %v1023, %v1011
    %v1041 = vadd.f32 %v1027, %v1012
    %v1042 = vadd.f32 %v1031, %v1013
    %v1043 = vadd.f32 %v1035, %v1014
    %v1044 = vadd.f32 %v1023, %v1015
    %v1045 = vadd.f32 %v1027, %v1016
    %v1046 = vadd.f32 %v1031, %v1017
    %v1047 = vadd.f32 %v1035, %v1018
    %v1048 = vmul.f32 %v782, %v1040
    %v1049 = vmul.f32 %v784, %v1041
    %v1050 = vmul.f32 %v868, %v1042
    %v1051 = vmul.f32 %v870, %v1043
    %v1052 = vmul.f32 %v786, %v1044
    %v1053 = vmul.f32 %v788, %v1045
    %v1054 = vmul.f32 %v872, %v1046
    %v1055 = vmul.f32 %v874, %v1047
    %v1056 = vpack.c.bf16 %v1052, %v1048
    %v1057 = vpack.c.bf16 %v1053, %v1049
    %v1058 = vpack.c.bf16 %v1054, %v1050
    %v1059 = vpack.c.bf16 %v1055, %v1051
    %v1060 = vld [vmem:[%s6] sm:$0xf]
    %v1061 = vld [vmem:[%s6 + $0x4] sm:$0xf]
    %v1062 = vld [vmem:[%s6 + $0x8] sm:$0xf]
    %v1063 = vld [vmem:[%s6 + $0xc] sm:$0xf]
    %v1064 = vld [vmem:[%s6 + $0x10] sm:$0xf]
    %v1065 = vld [vmem:[%s6 + $0x14] sm:$0xf]
    %v1066 = vld [vmem:[%s6 + $0x18] sm:$0xf]
    %v1067 = vld [vmem:[%s6 + $0x1c] sm:$0xf]
    %v1068 = vld [vmem:[%s6 + $0x20] sm:$0xf]
    %v1069 = vld [vmem:[%s6 + $0x24] sm:$0xf]
    %v1070 = vld [vmem:[%s6 + $0x28] sm:$0xf]
    %v1071 = vld [vmem:[%s6 + $0x2c] sm:$0xf]
    %v1072 = vld [vmem:[%s6 + $0x30] sm:$0xf]
    %v1073 = vld [vmem:[%s6 + $0x34] sm:$0xf]
    %v1074 = vld [vmem:[%s6 + $0x38] sm:$0xf]
    %v1075 = vld [vmem:[%s6 + $0x3c] sm:$0xf]
    %v1076 = vld [vmem:[%s6 + $0x40] sm:$0xf]
    %v1077 = vld [vmem:[%s6 + $0x44] sm:$0xf]
    %v1078 = vld [vmem:[%s6 + $0x48] sm:$0xf]
    %v1079 = vld [vmem:[%s6 + $0x4c] sm:$0xf]
    %v1080 = vld [vmem:[%s6 + $0x50] sm:$0xf]
    %v1081 = vld [vmem:[%s6 + $0x54] sm:$0xf]
    %v1082 = vld [vmem:[%s6 + $0x58] sm:$0xf]
    %v1083 = vld [vmem:[%s6 + $0x5c] sm:$0xf]
    %v1084 = vld [vmem:[%s6 + $0x60] sm:$0xf]
    %v1085 = vld [vmem:[%s6 + $0x64] sm:$0xf]
    %v1086 = vld [vmem:[%s6 + $0x68] sm:$0xf]
    %v1087 = vld [vmem:[%s6 + $0x6c] sm:$0xf]
    %v1088 = vld [vmem:[%s6 + $0x70] sm:$0xf]
    %v1089 = vld [vmem:[%s6 + $0x74] sm:$0xf]
    %v1090 = vld [vmem:[%s6 + $0x78] sm:$0xf]
    %v1091 = vld [vmem:[%s6 + $0x7c] sm:$0xf]
    %v1092 = vld [vmem:[%s6 + $0x80] sm:$0xf]
    %v1093 = vld [vmem:[%s6 + $0x84] sm:$0xf]
    %v1094 = vld [vmem:[%s6 + $0x88] sm:$0xf]
    %v1095 = vld [vmem:[%s6 + $0x8c] sm:$0xf]
    %v1096 = vld [vmem:[%s6 + $0x90] sm:$0xf]
    %v1097 = vld [vmem:[%s6 + $0x94] sm:$0xf]
    %v1098 = vld [vmem:[%s6 + $0x98] sm:$0xf]
    %v1099 = vld [vmem:[%s6 + $0x9c] sm:$0xf]
    %v1100 = vld [vmem:[%s6 + $0xa0] sm:$0xf]
    %v1101 = vld [vmem:[%s6 + $0xa4] sm:$0xf]
    %v1102 = vld [vmem:[%s6 + $0xa8] sm:$0xf]
    %v1103 = vld [vmem:[%s6 + $0xac] sm:$0xf]
    %v1104 = vld [vmem:[%s6 + $0xb0] sm:$0xf]
    %v1105 = vld [vmem:[%s6 + $0xb4] sm:$0xf]
    %v1106 = vld [vmem:[%s6 + $0xb8] sm:$0xf]
    %v1107 = vld [vmem:[%s6 + $0xbc] sm:$0xf]
    %v1108 = vld [vmem:[%s6 + $0xc0] sm:$0xf]
    %v1109 = vld [vmem:[%s6 + $0xc4] sm:$0xf]
    %v1110 = vld [vmem:[%s6 + $0xc8] sm:$0xf]
    %v1111 = vld [vmem:[%s6 + $0xcc] sm:$0xf]
    %v1112 = vld [vmem:[%s6 + $0xd0] sm:$0xf]
    %v1113 = vld [vmem:[%s6 + $0xd4] sm:$0xf]
    %v1114 = vld [vmem:[%s6 + $0xd8] sm:$0xf]
    %v1115 = vld [vmem:[%s6 + $0xdc] sm:$0xf]
    %v1116 = vld [vmem:[%s6 + $0xe0] sm:$0xf]
    %v1117 = vld [vmem:[%s6 + $0xe4] sm:$0xf]
    %v1118 = vld [vmem:[%s6 + $0xe8] sm:$0xf]
    %v1119 = vld [vmem:[%s6 + $0xec] sm:$0xf]
    %v1120 = vld [vmem:[%s6 + $0xf0] sm:$0xf]
    %v1121 = vld [vmem:[%s6 + $0xf4] sm:$0xf]
    %v1122 = vld [vmem:[%s6 + $0xf8] sm:$0xf]
    %v1123 = vld [vmem:[%s6 + $0xfc] sm:$0xf]
    %v1124 = vld [vmem:[%s9 + $0xb] sm:$0x1]
    %v1125 = vlaneseq
    %v1126 = vshrl.u32 %v1125, 7
    %v1127 = vsub.s32 0, %v1126
    %v1128 = vrot.slane %v1124, %v1127
    %v1193 = vunpack.c.l.b16 %v1060
    %v1194 = vunpack.c.l.b16 %v1061
    %v1195 = vunpack.c.l.b16 %v1062
    %v1196 = vunpack.c.l.b16 %v1063
    %v1197 = vunpack.c.l.b16 %v1064
    %v1198 = vunpack.c.l.b16 %v1065
    %v1199 = vunpack.c.l.b16 %v1066
    %v1200 = vunpack.c.l.b16 %v1067
    %v1201 = vunpack.c.l.b16 %v1068
    %v1202 = vunpack.c.l.b16 %v1069
    %v1203 = vunpack.c.l.b16 %v1070
    %v1204 = vunpack.c.l.b16 %v1071
    %v1205 = vunpack.c.l.b16 %v1072
    %v1206 = vunpack.c.l.b16 %v1073
    %v1207 = vunpack.c.l.b16 %v1074
    %v1208 = vunpack.c.l.b16 %v1075
    %v1209 = vunpack.c.l.b16 %v1076
    %v1210 = vunpack.c.l.b16 %v1077
    %v1211 = vunpack.c.l.b16 %v1078
    %v1212 = vunpack.c.l.b16 %v1079
    %v1213 = vunpack.c.l.b16 %v1080
    %v1214 = vunpack.c.l.b16 %v1081
    %v1215 = vunpack.c.l.b16 %v1082
    %v1216 = vunpack.c.l.b16 %v1083
    %v1217 = vunpack.c.l.b16 %v1084
    %v1218 = vunpack.c.l.b16 %v1085
    %v1219 = vunpack.c.l.b16 %v1086
    %v1220 = vunpack.c.l.b16 %v1087
    %v1221 = vunpack.c.l.b16 %v1088
    %v1222 = vunpack.c.l.b16 %v1089
    %v1223 = vunpack.c.l.b16 %v1090
    %v1224 = vunpack.c.l.b16 %v1091
    %v1225 = vunpack.c.l.b16 %v1092
    %v1226 = vunpack.c.l.b16 %v1093
    %v1227 = vunpack.c.l.b16 %v1094
    %v1228 = vunpack.c.l.b16 %v1095
    %v1229 = vunpack.c.l.b16 %v1096
    %v1230 = vunpack.c.l.b16 %v1097
    %v1231 = vunpack.c.l.b16 %v1098
    %v1232 = vunpack.c.l.b16 %v1099
    %v1233 = vunpack.c.l.b16 %v1100
    %v1234 = vunpack.c.l.b16 %v1101
    %v1235 = vunpack.c.l.b16 %v1102
    %v1236 = vunpack.c.l.b16 %v1103
    %v1237 = vunpack.c.l.b16 %v1104
    %v1238 = vunpack.c.l.b16 %v1105
    %v1239 = vunpack.c.l.b16 %v1106
    %v1240 = vunpack.c.l.b16 %v1107
    %v1241 = vunpack.c.l.b16 %v1108
    %v1242 = vunpack.c.l.b16 %v1109
    %v1243 = vunpack.c.l.b16 %v1110
    %v1244 = vunpack.c.l.b16 %v1111
    %v1245 = vunpack.c.l.b16 %v1112
    %v1246 = vunpack.c.l.b16 %v1113
    %v1247 = vunpack.c.l.b16 %v1114
    %v1248 = vunpack.c.l.b16 %v1115
    %v1249 = vunpack.c.l.b16 %v1116
    %v1250 = vunpack.c.l.b16 %v1117
    %v1251 = vunpack.c.l.b16 %v1118
    %v1252 = vunpack.c.l.b16 %v1119
    %v1253 = vunpack.c.l.b16 %v1120
    %v1254 = vunpack.c.l.b16 %v1121
    %v1255 = vunpack.c.l.b16 %v1122
    %v1256 = vunpack.c.l.b16 %v1123
    %v1257 = vpack.c.b16 %v1194, %v1193
    %v1258 = vpack.c.b16 %v1196, %v1195
    %v1259 = vpack.c.b16 %v1198, %v1197
    %v1260 = vpack.c.b16 %v1200, %v1199
    %v1261 = vpack.c.b16 %v1202, %v1201
    %v1262 = vpack.c.b16 %v1204, %v1203
    %v1263 = vpack.c.b16 %v1206, %v1205
    %v1264 = vpack.c.b16 %v1208, %v1207
    %v1265 = vpack.c.b16 %v1210, %v1209
    %v1266 = vpack.c.b16 %v1212, %v1211
    %v1267 = vpack.c.b16 %v1214, %v1213
    %v1268 = vpack.c.b16 %v1216, %v1215
    %v1269 = vpack.c.b16 %v1218, %v1217
    %v1270 = vpack.c.b16 %v1220, %v1219
    %v1271 = vpack.c.b16 %v1222, %v1221
    %v1272 = vpack.c.b16 %v1224, %v1223
    %v1273 = vpack.c.b16 %v1226, %v1225
    %v1274 = vpack.c.b16 %v1228, %v1227
    %v1275 = vpack.c.b16 %v1230, %v1229
    %v1276 = vpack.c.b16 %v1232, %v1231
    %v1277 = vpack.c.b16 %v1234, %v1233
    %v1278 = vpack.c.b16 %v1236, %v1235
    %v1279 = vpack.c.b16 %v1238, %v1237
    %v1280 = vpack.c.b16 %v1240, %v1239
    %v1281 = vpack.c.b16 %v1242, %v1241
    %v1282 = vpack.c.b16 %v1244, %v1243
    %v1283 = vpack.c.b16 %v1246, %v1245
    %v1284 = vpack.c.b16 %v1248, %v1247
    %v1285 = vpack.c.b16 %v1250, %v1249
    %v1286 = vpack.c.b16 %v1252, %v1251
    %v1287 = vpack.c.b16 %v1254, %v1253
    %v1288 = vpack.c.b16 %v1256, %v1255
    %1321 = vmatprep.subr.bf16.mxu0 0
    %1322 = vmatpush1.bf16.msra.mxu0 %v1257
    %1323 = vmatprep.subr.bf16.mxu0 0
    %1324 = vmatpush1.bf16.msra.mxu0 %v1258
    %1325 = vmatprep.subr.bf16.mxu0 0
    %1326 = vmatpush1.bf16.msra.mxu0 %v1259
    %1327 = vmatprep.subr.bf16.mxu0 0
    %1328 = vmatpush1.bf16.msra.mxu0 %v1260
    %1329 = vmatprep.subr.bf16.mxu0 0
    %1330 = vmatpush1.bf16.msra.mxu0 %v1261
    %1331 = vmatprep.subr.bf16.mxu0 0
    %1332 = vmatpush1.bf16.msra.mxu0 %v1262
    %1333 = vmatprep.subr.bf16.mxu0 0
    %1334 = vmatpush1.bf16.msra.mxu0 %v1263
    %1335 = vmatprep.subr.bf16.mxu0 0
    %1336 = vmatpush1.bf16.msra.mxu0 %v1264
    %1337 = vmatprep.subr.bf16.mxu0 0
    %1338 = vmatpush1.bf16.msra.mxu0 %v1265
    %1339 = vmatprep.subr.bf16.mxu0 0
    %1340 = vmatpush1.bf16.msra.mxu0 %v1266
    %1341 = vmatprep.subr.bf16.mxu0 0
    %1342 = vmatpush1.bf16.msra.mxu0 %v1267
    %1343 = vmatprep.subr.bf16.mxu0 0
    %1344 = vmatpush1.bf16.msra.mxu0 %v1268
    %1345 = vmatprep.subr.bf16.mxu0 0
    %1346 = vmatpush1.bf16.msra.mxu0 %v1269
    %1347 = vmatprep.subr.bf16.mxu0 0
    %1348 = vmatpush1.bf16.msra.mxu0 %v1270
    %1349 = vmatprep.subr.bf16.mxu0 0
    %1350 = vmatpush1.bf16.msra.mxu0 %v1271
    %1351 = vmatprep.subr.bf16.mxu0 0
    %1352 = vmatpush1.bf16.msra.mxu0 %v1272
    %1353 = vmatprep.mubr.bf16.mxu0 %v1057
    %1354 = vmatmul.mubr.bf16.gmra.mrb[0].mxu0 %v1056
    %v1355 = vpop.f32.mrb[0].mxu0
    %v1356 = vadd.f32 %v1128, %v1355
    %v1357 = vpop.f32.mrb[0].mxu0
    %v1358 = vpop.f32.mrb[0].mxu0
    %v1359 = vadd.f32 %v1128, %v1358
    %v1360 = vpop.f32.mrb[0].mxu0
    %1361 = vdwg.mxu0
    %1362 = vmatprep.subr.bf16.mxu0 0
    %1363 = vmatpush1.bf16.msra.mxu0 %v1273
    %1364 = vmatprep.subr.bf16.mxu0 0
    %1365 = vmatpush1.bf16.msra.mxu0 %v1274
    %1366 = vmatprep.subr.bf16.mxu0 0
    %1367 = vmatpush1.bf16.msra.mxu0 %v1275
    %1368 = vmatprep.subr.bf16.mxu0 0
    %1369 = vmatpush1.bf16.msra.mxu0 %v1276
    %1370 = vmatprep.subr.bf16.mxu0 0
    %1371 = vmatpush1.bf16.msra.mxu0 %v1277
    %1372 = vmatprep.subr.bf16.mxu0 0
    %1373 = vmatpush1.bf16.msra.mxu0 %v1278
    %1374 = vmatprep.subr.bf16.mxu0 0
    %1375 = vmatpush1.bf16.msra.mxu0 %v1279
    %1376 = vmatprep.subr.bf16.mxu0 0
    %1377 = vmatpush1.bf16.msra.mxu0 %v1280
    %1378 = vmatprep.subr.bf16.mxu0 0
    %1379 = vmatpush1.bf16.msra.mxu0 %v1281
    %1380 = vmatprep.subr.bf16.mxu0 0
    %1381 = vmatpush1.bf16.msra.mxu0 %v1282
    %1382 = vmatprep.subr.bf16.mxu0 0
    %1383 = vmatpush1.bf16.msra.mxu0 %v1283
    %1384 = vmatprep.subr.bf16.mxu0 0
    %1385 = vmatpush1.bf16.msra.mxu0 %v1284
    %1386 = vmatprep.subr.bf16.mxu0 0
    %1387 = vmatpush1.bf16.msra.mxu0 %v1285
    %1388 = vmatprep.subr.bf16.mxu0 0
    %1389 = vmatpush1.bf16.msra.mxu0 %v1286
    %1390 = vmatprep.subr.bf16.mxu0 0
    %1391 = vmatpush1.bf16.msra.mxu0 %v1287
    %1392 = vmatprep.subr.bf16.mxu0 0
    %1393 = vmatpush1.bf16.msra.mxu0 %v1288
    %1394 = vmatprep.mubr.bf16.mxu0 %v1059
    %1395 = vmatmul.mubr.bf16.gmra.mrb[0].mxu0 %v1058
    %v1396 = vpop.f32.mrb[0].mxu0
    %v1397 = vadd.f32 %v1356, %v1396
    %v1398 = vpop.f32.mrb[0].mxu0
    %v1399 = vpop.f32.mrb[0].mxu0
    %v1400 = vadd.f32 %v1359, %v1399
    %v1401 = vpop.f32.mrb[0].mxu0
    %1402 = vdwg.mxu0
    %v1403 = vmul.f32 %v1397, %v84
    %v1404 = vmul.f32 %v1400, %v85
    %v1405 = vld [vmem:[%s7] sm:$0xff]
    %vm1406 = vcmask 64512
    %v1408 = vsel %vm1406, %v1403, 0
    %v1411 = vsel %vm1406, %v1404, 0
    %1413 = vmatprep.subr.mxu0 0.0
    %1414 = vmatpush1.msra.mxu0 %v1405
    %1415 = vmatprep.subr.mxu0 0.0
    %1416 = vmatpush1.msra.mxu0 0.0
    %1417 = vmatprep.subr.mxu0 0.0
    %1418 = vmatpush1.msra.mxu0 0.0
    %1419 = vmatprep.subr.mxu0 0.0
    %1420 = vmatpush1.msra.mxu0 0.0
    %1421 = vmatprep.subr.mxu0 0.0
    %1422 = vmatpush1.msra.mxu0 0.0
    %1423 = vmatprep.subr.mxu0 0.0
    %1424 = vmatpush1.msra.mxu0 0.0
    %1425 = vmatprep.subr.mxu0 0.0
    %1426 = vmatpush1.msra.mxu0 0.0
    %1427 = vmatprep.subr.mxu0 0.0
    %1428 = vmatpush1.msra.mxu0 0.0
    %1429 = vmatprep.subr.mxu0 0.0
    %1430 = vmatpush1.msra.mxu0 0.0
    %1431 = vmatprep.subr.mxu0 0.0
    %1432 = vmatpush1.msra.mxu0 0.0
    %1433 = vmatprep.subr.mxu0 0.0
    %1434 = vmatpush1.msra.mxu0 0.0
    %1435 = vmatprep.subr.mxu0 0.0
    %1436 = vmatpush1.msra.mxu0 0.0
    %1437 = vmatprep.subr.mxu0 0.0
    %1438 = vmatpush1.msra.mxu0 0.0
    %1439 = vmatprep.subr.mxu0 0.0
    %1440 = vmatpush1.msra.mxu0 0.0
    %1441 = vmatprep.subr.mxu0 0.0
    %1442 = vmatpush1.msra.mxu0 0.0
    %1443 = vmatprep.subr.mxu0 0.0
    %1444 = vmatpush1.msra.mxu0 0.0
    %1445 = vmatprep.subr.mxu0 0.0
    %1446 = vmatpush1.msra.mxu0 0.0
    %1447 = vmatprep.subr.mxu0 0.0
    %1448 = vmatpush1.msra.mxu0 0.0
    %1449 = vmatprep.subr.mxu0 0.0
    %1450 = vmatpush1.msra.mxu0 0.0
    %1451 = vmatprep.subr.mxu0 0.0
    %1452 = vmatpush1.msra.mxu0 0.0
    %1453 = vmatprep.subr.mxu0 0.0
    %1454 = vmatpush1.msra.mxu0 0.0
    %1455 = vmatprep.subr.mxu0 0.0
    %1456 = vmatpush1.msra.mxu0 0.0
    %1457 = vmatprep.subr.mxu0 0.0
    %1458 = vmatpush1.msra.mxu0 0.0
    %1459 = vmatprep.subr.mxu0 0.0
    %1460 = vmatpush1.msra.mxu0 0.0
    %1461 = vmatprep.subr.mxu0 0.0
    %1462 = vmatpush1.msra.mxu0 0.0
    %1463 = vmatprep.subr.mxu0 0.0
    %1464 = vmatpush1.msra.mxu0 0.0
    %1465 = vmatprep.subr.mxu0 0.0
    %1466 = vmatpush1.msra.mxu0 0.0
    %1467 = vmatprep.subr.mxu0 0.0
    %1468 = vmatpush1.msra.mxu0 0.0
    %1469 = vmatprep.subr.mxu0 0.0
    %1470 = vmatpush1.msra.mxu0 0.0
    %1471 = vmatprep.subr.mxu0 0.0
    %1472 = vmatpush1.msra.mxu0 0.0
    %1473 = vmatprep.subr.mxu0 0.0
    %1474 = vmatpush1.msra.mxu0 0.0
    %1475 = vmatprep.subr.mxu0 0.0
    %1476 = vmatpush1.msra.mxu0 0.0
    %1477 = vmatprep.mubr.f32.mxu0 0.0
    %1478 = vmatmul.mubr.f32.gmra.mrb[0].mxu0 %v1408
    %v1479 = vpop.f32.mrb[0].mxu0
    %v1480 = vadd.f32 0.0, %v1479
    %v1481 = vpop.f32.mrb[0].mxu0
    %1482 = vmatprep.mubr.f32.mxu0 0.0
    %1483 = vmatmul.mubr.f32.gmra.mrb[0].mxu0 %v1411
    %v1484 = vpop.f32.mrb[0].mxu0
    %v1485 = vadd.f32 0.0, %v1484
    %v1486 = vpop.f32.mrb[0].mxu0
    %1487 = vdwg.mxu0
    %v1488 = vunpack.c.l.bf16 %v74
    %v1489 = vunpack.c.l.bf16 %v75
    %v1490 = vmul.f32 %v1480, %v1488
    %v1491 = vmul.f32 %v1485, %v1489
    %v1492 = vld [vmem:[%s8] sm:$0xff]
    %v1493 = vld [vmem:[%s8 + $0x8] sm:$0xff]
    %v1494 = vld [vmem:[%s8 + $0x10] sm:$0xff]
    %v1495 = vld [vmem:[%s8 + $0x18] sm:$0xff]
    %v1496 = vld [vmem:[%s8 + $0x20] sm:$0xff]
    %v1497 = vld [vmem:[%s8 + $0x28] sm:$0xff]
    %v1498 = vld [vmem:[%s8 + $0x30] sm:$0xff]
    %v1499 = vld [vmem:[%s8 + $0x38] sm:$0xff]
    %v1500 = vld [vmem:[%s8 + $0x40] sm:$0xff]
    %v1501 = vld [vmem:[%s8 + $0x48] sm:$0xff]
    %v1502 = vld [vmem:[%s8 + $0x50] sm:$0xff]
    %v1503 = vld [vmem:[%s8 + $0x58] sm:$0xff]
    %v1504 = vld [vmem:[%s8 + $0x60] sm:$0xff]
    %v1505 = vld [vmem:[%s8 + $0x68] sm:$0xff]
    %v1506 = vld [vmem:[%s8 + $0x70] sm:$0xff]
    %v1507 = vld [vmem:[%s8 + $0x78] sm:$0xff]
    %1508 = vmatprep.subr.mxu0 0.0
    %1509 = vmatpush1.msra.mxu0 %v1492
    %1510 = vmatprep.subr.mxu0 0.0
    %1511 = vmatpush1.msra.mxu0 %v1493
    %1512 = vmatprep.subr.mxu0 0.0
    %1513 = vmatpush1.msra.mxu0 %v1494
    %1514 = vmatprep.subr.mxu0 0.0
    %1515 = vmatpush1.msra.mxu0 %v1495
    %1516 = vmatprep.subr.mxu0 0.0
    %1517 = vmatpush1.msra.mxu0 %v1496
    %1518 = vmatprep.subr.mxu0 0.0
    %1519 = vmatpush1.msra.mxu0 %v1497
    %1520 = vmatprep.subr.mxu0 0.0
    %1521 = vmatpush1.msra.mxu0 %v1498
    %1522 = vmatprep.subr.mxu0 0.0
    %1523 = vmatpush1.msra.mxu0 %v1499
    %1524 = vmatprep.subr.mxu0 0.0
    %1525 = vmatpush1.msra.mxu0 %v1500
    %1526 = vmatprep.subr.mxu0 0.0
    %1527 = vmatpush1.msra.mxu0 %v1501
    %1528 = vmatprep.subr.mxu0 0.0
    %1529 = vmatpush1.msra.mxu0 %v1502
    %1530 = vmatprep.subr.mxu0 0.0
    %1531 = vmatpush1.msra.mxu0 %v1503
    %1532 = vmatprep.subr.mxu0 0.0
    %1533 = vmatpush1.msra.mxu0 %v1504
    %1534 = vmatprep.subr.mxu0 0.0
    %1535 = vmatpush1.msra.mxu0 %v1505
    %1536 = vmatprep.subr.mxu0 0.0
    %1537 = vmatpush1.msra.mxu0 %v1506
    %1538 = vmatprep.subr.mxu0 0.0
    %1539 = vmatpush1.msra.mxu0 %v1507
    %1540 = vmatprep.subr.mxu0 0.0
    %1541 = vmatpush1.msra.mxu0 0.0
    %1542 = vmatprep.subr.mxu0 0.0
    %1543 = vmatpush1.msra.mxu0 0.0
    %1544 = vmatprep.subr.mxu0 0.0
    %1545 = vmatpush1.msra.mxu0 0.0
    %1546 = vmatprep.subr.mxu0 0.0
    %1547 = vmatpush1.msra.mxu0 0.0
    %1548 = vmatprep.subr.mxu0 0.0
    %1549 = vmatpush1.msra.mxu0 0.0
    %1550 = vmatprep.subr.mxu0 0.0
    %1551 = vmatpush1.msra.mxu0 0.0
    %1552 = vmatprep.subr.mxu0 0.0
    %1553 = vmatpush1.msra.mxu0 0.0
    %1554 = vmatprep.subr.mxu0 0.0
    %1555 = vmatpush1.msra.mxu0 0.0
    %1556 = vmatprep.subr.mxu0 0.0
    %1557 = vmatpush1.msra.mxu0 0.0
    %1558 = vmatprep.subr.mxu0 0.0
    %1559 = vmatpush1.msra.mxu0 0.0
    %1560 = vmatprep.subr.mxu0 0.0
    %1561 = vmatpush1.msra.mxu0 0.0
    %1562 = vmatprep.subr.mxu0 0.0
    %1563 = vmatpush1.msra.mxu0 0.0
    %1564 = vmatprep.subr.mxu0 0.0
    %1565 = vmatpush1.msra.mxu0 0.0
    %1566 = vmatprep.subr.mxu0 0.0
    %1567 = vmatpush1.msra.mxu0 0.0
    %1568 = vmatprep.subr.mxu0 0.0
    %1569 = vmatpush1.msra.mxu0 0.0
    %1570 = vmatprep.subr.mxu0 0.0
    %1571 = vmatpush1.msra.mxu0 0.0
    %1572 = vmatprep.mubr.f32.mxu0 0.0
    %1573 = vmatmul.mubr.f32.gmra.mrb[0].mxu0 %v1490
    %v1574 = vpop.f32.mrb[0].mxu0
    %v1575 = vadd.f32 0.0, %v1574
    %v1576 = vpop.f32.mrb[0].mxu0
    %1577 = vmatprep.mubr.f32.mxu0 0.0
    %1578 = vmatmul.mubr.f32.gmra.mrb[0].mxu0 %v1491
    %v1579 = vpop.f32.mrb[0].mxu0
    %v1580 = vadd.f32 0.0, %v1579
    %v1581 = vpop.f32.mrb[0].mxu0
    %1582 = vdwg.mxu0
    %1585 = vrot.lane.b32.xlu0 %v1575, 32
    %v1586 = vpop.permute.xlu0 %1585
    %1587 = vrot.lane.b32.xlu0 %v1580, 32
    %v1588 = vpop.permute.xlu0 %1587
    %vm1591 = vcmask 261120
    %v1592 = vsel %vm1591, %v80, %v1586
    %v1593 = vsel %vm1591, %v81, %v1588
    %v1594 = vld [vmem:[%s9] sm:$0x1]
    %v1595 = vlaneseq
    %v1596 = vshrl.u32 %v1595, 7
    %v1597 = vsub.s32 0, %v1596
    %v1598 = vrot.slane %v1594, %v1597
    %v1599 = vmul.f32 %v1592, %v1598
    %v1600 = vmul.f32 %v1593, %v1598
    %v1601 = vld [vmem:[%s9 + $0x1] sm:$0x1]
    %v1602 = vlaneseq
    %v1603 = vshrl.u32 %v1602, 7
    %v1604 = vsub.s32 0, %v1603
    %v1605 = vrot.slane %v1601, %v1604
    %v1606 = vadd.f32 %v1599, %v1605
    %v1607 = vadd.f32 %v1600, %v1605
    %v1608 = vpack.c.bf16 %v1607, %v1606
    %v1609 = vld [vmem:[%s10] sm:$0xf]
    %v1610 = vld [vmem:[%s10 + $0x4] sm:$0xf]
    %v1611 = vld [vmem:[%s10 + $0x8] sm:$0xf]
    %v1612 = vld [vmem:[%s10 + $0xc] sm:$0xf]
    %v1613 = vld [vmem:[%s10 + $0x10] sm:$0xf]
    %v1614 = vld [vmem:[%s10 + $0x14] sm:$0xf]
    %v1615 = vld [vmem:[%s9 + $0x2] sm:$0x1]
    %v1616 = vlaneseq
    %v1617 = vshrl.u32 %v1616, 7
    %v1618 = vsub.s32 0, %v1617
    %v1619 = vrot.slane %v1615, %v1618
    %v1626 = vunpack.c.l.b16 %v1609
    %v1627 = vunpack.c.l.b16 %v1610
    %v1628 = vunpack.c.l.b16 %v1611
    %v1629 = vunpack.c.l.b16 %v1612
    %v1630 = vunpack.c.l.b16 %v1613
    %v1631 = vunpack.c.l.b16 %v1614
    %v1632 = vpack.c.b16 %v1627, %v1626
    %v1633 = vpack.c.b16 %v1629, %v1628
    %v1634 = vpack.c.b16 %v1631, %v1630
    %vm1638 = vcmask 392192
    %v1640 = vsel %vm1638, %v1608, 0
    %1642 = vmatprep.subr.bf16.mxu0 0
    %1643 = vmatpush1.bf16.msra.mxu0 %v1632
    %1644 = vmatprep.subr.bf16.mxu0 0
    %1645 = vmatpush1.bf16.msra.mxu0 %v1633
    %1646 = vmatprep.subr.bf16.mxu0 0
    %1647 = vmatpush1.bf16.msra.mxu0 %v1634
    %1648 = vmatprep.subr.bf16.mxu0 0
    %1649 = vmatpush1.bf16.msra.mxu0 0
    %1650 = vmatprep.subr.bf16.mxu0 0
    %1651 = vmatpush1.bf16.msra.mxu0 0
    %1652 = vmatprep.subr.bf16.mxu0 0
    %1653 = vmatpush1.bf16.msra.mxu0 0
    %1654 = vmatprep.subr.bf16.mxu0 0
    %1655 = vmatpush1.bf16.msra.mxu0 0
    %1656 = vmatprep.subr.bf16.mxu0 0
    %1657 = vmatpush1.bf16.msra.mxu0 0
    %1658 = vmatprep.subr.bf16.mxu0 0
    %1659 = vmatpush1.bf16.msra.mxu0 0
    %1660 = vmatprep.subr.bf16.mxu0 0
    %1661 = vmatpush1.bf16.msra.mxu0 0
    %1662 = vmatprep.subr.bf16.mxu0 0
    %1663 = vmatpush1.bf16.msra.mxu0 0
    %1664 = vmatprep.subr.bf16.mxu0 0
    %1665 = vmatpush1.bf16.msra.mxu0 0
    %1666 = vmatprep.subr.bf16.mxu0 0
    %1667 = vmatpush1.bf16.msra.mxu0 0
    %1668 = vmatprep.subr.bf16.mxu0 0
    %1669 = vmatpush1.bf16.msra.mxu0 0
    %1670 = vmatprep.subr.bf16.mxu0 0
    %1671 = vmatpush1.bf16.msra.mxu0 0
    %1672 = vmatprep.subr.bf16.mxu0 0
    %1673 = vmatpush1.bf16.msra.mxu0 0
    %1674 = vmatprep.mubr.bf16.mxu0 0
    %1675 = vmatmul.mubr.bf16.gmra.mrb[0].mxu0 %v1640
    %v1676 = vpop.f32.mrb[0].mxu0
    %v1677 = vadd.f32 %v1619, %v1676
    %v1678 = vpop.f32.mrb[0].mxu0
    %v1679 = vpop.f32.mrb[0].mxu0
    %v1680 = vadd.f32 %v1619, %v1679
    %v1681 = vpop.f32.mrb[0].mxu0
    %1682 = vdwg.mxu0
    %v1683 = vmax.f32 %v1677, 0.0
    %v1684 = vmax.f32 %v1680, 0.0
    %v1685 = vpack.c.bf16 %v1684, %v1683
    %v1686 = vld [vmem:[%s11] sm:$0xf]
    %v1687 = vld [vmem:[%s11 + $0x4] sm:$0xf]
    %v1688 = vld [vmem:[%s11 + $0x8] sm:$0xf]
    %v1689 = vld [vmem:[%s11 + $0xc] sm:$0xf]
    %v1690 = vld [vmem:[%s11 + $0x10] sm:$0xf]
    %v1691 = vld [vmem:[%s11 + $0x14] sm:$0xf]
    %v1692 = vld [vmem:[%s11 + $0x18] sm:$0xf]
    %v1693 = vld [vmem:[%s11 + $0x1c] sm:$0xf]
    %v1694 = vld [vmem:[%s9 + $0x3] sm:$0x1]
    %v1695 = vlaneseq
    %v1696 = vshrl.u32 %v1695, 7
    %v1697 = vsub.s32 0, %v1696
    %v1698 = vrot.slane %v1694, %v1697
    %v1707 = vunpack.c.l.b16 %v1686
    %v1708 = vunpack.c.l.b16 %v1687
    %v1709 = vunpack.c.l.b16 %v1688
    %v1710 = vunpack.c.l.b16 %v1689
    %v1711 = vunpack.c.l.b16 %v1690
    %v1712 = vunpack.c.l.b16 %v1691
    %v1713 = vunpack.c.l.b16 %v1692
    %v1714 = vunpack.c.l.b16 %v1693
    %v1715 = vpack.c.b16 %v1708, %v1707
    %v1716 = vpack.c.b16 %v1710, %v1709
    %v1717 = vpack.c.b16 %v1712, %v1711
    %v1718 = vpack.c.b16 %v1714, %v1713
    %vm1723 = vcmask 523264
    %v1725 = vsel %vm1723, %v1685, 0
    %1727 = vmatprep.subr.bf16.mxu0 0
    %1728 = vmatpush1.bf16.msra.mxu0 %v1715
    %1729 = vmatprep.subr.bf16.mxu0 0
    %1730 = vmatpush1.bf16.msra.mxu0 %v1716
    %1731 = vmatprep.subr.bf16.mxu0 0
    %1732 = vmatpush1.bf16.msra.mxu0 %v1717
    %1733 = vmatprep.subr.bf16.mxu0 0
    %1734 = vmatpush1.bf16.msra.mxu0 %v1718
    %1735 = vmatprep.subr.bf16.mxu0 0
    %1736 = vmatpush1.bf16.msra.mxu0 0
    %1737 = vmatprep.subr.bf16.mxu0 0
    %1738 = vmatpush1.bf16.msra.mxu0 0
    %1739 = vmatprep.subr.bf16.mxu0 0
    %1740 = vmatpush1.bf16.msra.mxu0 0
    %1741 = vmatprep.subr.bf16.mxu0 0
    %1742 = vmatpush1.bf16.msra.mxu0 0
    %1743 = vmatprep.subr.bf16.mxu0 0
    %1744 = vmatpush1.bf16.msra.mxu0 0
    %1745 = vmatprep.subr.bf16.mxu0 0
    %1746 = vmatpush1.bf16.msra.mxu0 0
    %1747 = vmatprep.subr.bf16.mxu0 0
    %1748 = vmatpush1.bf16.msra.mxu0 0
    %1749 = vmatprep.subr.bf16.mxu0 0
    %1750 = vmatpush1.bf16.msra.mxu0 0
    %1751 = vmatprep.subr.bf16.mxu0 0
    %1752 = vmatpush1.bf16.msra.mxu0 0
    %1753 = vmatprep.subr.bf16.mxu0 0
    %1754 = vmatpush1.bf16.msra.mxu0 0
    %1755 = vmatprep.subr.bf16.mxu0 0
    %1756 = vmatpush1.bf16.msra.mxu0 0
    %1757 = vmatprep.subr.bf16.mxu0 0
    %1758 = vmatpush1.bf16.msra.mxu0 0
    %1759 = vmatprep.mubr.bf16.mxu0 0
    %1760 = vmatmul.mubr.bf16.gmra.mrb[0].mxu0 %v1725
    %v1761 = vpop.f32.mrb[0].mxu0
    %v1762 = vadd.f32 %v1698, %v1761
    %v1763 = vpop.f32.mrb[0].mxu0
    %v1764 = vpop.f32.mrb[0].mxu0
    %v1765 = vadd.f32 %v1698, %v1764
    %v1766 = vpop.f32.mrb[0].mxu0
    %1767 = vdwg.mxu0
    %v1768 = vmax.f32 %v1762, 0.0
    %v1769 = vmax.f32 %v1765, 0.0
    %v1770 = vpack.c.bf16 %v1769, %v1768
    %v1771 = vld [vmem:[%s12] sm:$0xf]
    %v1772 = vld [vmem:[%s12 + $0x4] sm:$0xf]
    %v1773 = vld [vmem:[%s12 + $0x8] sm:$0xf]
    %v1774 = vld [vmem:[%s12 + $0xc] sm:$0xf]
    %v1775 = vld [vmem:[%s9 + $0x4] sm:$0x1]
    %v1776 = vlaneseq
    %v1777 = vshrl.u32 %v1776, 7
    %v1778 = vsub.s32 0, %v1777
    %v1779 = vrot.slane %v1775, %v1778
    %v1784 = vunpack.c.l.b16 %v1771
    %v1785 = vunpack.c.l.b16 %v1772
    %v1786 = vunpack.c.l.b16 %v1773
    %v1787 = vunpack.c.l.b16 %v1774
    %v1788 = vpack.c.b16 %v1785, %v1784
    %v1789 = vpack.c.b16 %v1787, %v1786
    %v1793 = vsel %vm1591, %v1770, 0
    %1795 = vmatprep.subr.bf16.mxu0 0
    %1796 = vmatpush1.bf16.msra.mxu0 %v1788
    %1797 = vmatprep.subr.bf16.mxu0 0
    %1798 = vmatpush1.bf16.msra.mxu0 %v1789
    %1799 = vmatprep.subr.bf16.mxu0 0
    %1800 = vmatpush1.bf16.msra.mxu0 0
    %1801 = vmatprep.subr.bf16.mxu0 0
    %1802 = vmatpush1.bf16.msra.mxu0 0
    %1803 = vmatprep.subr.bf16.mxu0 0
    %1804 = vmatpush1.bf16.msra.mxu0 0
    %1805 = vmatprep.subr.bf16.mxu0 0
    %1806 = vmatpush1.bf16.msra.mxu0 0
    %1807 = vmatprep.subr.bf16.mxu0 0
    %1808 = vmatpush1.bf16.msra.mxu0 0
    %1809 = vmatprep.subr.bf16.mxu0 0
    %1810 = vmatpush1.bf16.msra.mxu0 0
    %1811 = vmatprep.subr.bf16.mxu0 0
    %1812 = vmatpush1.bf16.msra.mxu0 0
    %1813 = vmatprep.subr.bf16.mxu0 0
    %1814 = vmatpush1.bf16.msra.mxu0 0
    %1815 = vmatprep.subr.bf16.mxu0 0
    %1816 = vmatpush1.bf16.msra.mxu0 0
    %1817 = vmatprep.subr.bf16.mxu0 0
    %1818 = vmatpush1.bf16.msra.mxu0 0
    %1819 = vmatprep.subr.bf16.mxu0 0
    %1820 = vmatpush1.bf16.msra.mxu0 0
    %1821 = vmatprep.subr.bf16.mxu0 0
    %1822 = vmatpush1.bf16.msra.mxu0 0
    %1823 = vmatprep.subr.bf16.mxu0 0
    %1824 = vmatpush1.bf16.msra.mxu0 0
    %1825 = vmatprep.subr.bf16.mxu0 0
    %1826 = vmatpush1.bf16.msra.mxu0 0
    %1827 = vmatprep.mubr.bf16.mxu0 0
    %1828 = vmatmul.mubr.bf16.gmra.mrb[0].mxu0 %v1793
    %v1829 = vpop.f32.mrb[0].mxu0
    %v1830 = vadd.f32 %v1779, %v1829
    %v1831 = vpop.f32.mrb[0].mxu0
    %v1832 = vpop.f32.mrb[0].mxu0
    %v1833 = vadd.f32 %v1779, %v1832
    %v1834 = vpop.f32.mrb[0].mxu0
    %1835 = vdwg.mxu0
    %v1836 = vmul.f32 %v1830, %v1592
    %v1837 = vmul.f32 %v1833, %v1593
    %v1838 = vpack.c.bf16 %v1837, %v1836
    %v1839 = vld [vmem:[%s13] sm:$0xf]
    %v1840 = vld [vmem:[%s13 + $0x4] sm:$0xf]
    %v1841 = vld [vmem:[%s13 + $0x8] sm:$0xf]
    %v1842 = vld [vmem:[%s13 + $0xc] sm:$0xf]
    %v1843 = vld [vmem:[%s13 + $0x10] sm:$0xf]
    %v1844 = vld [vmem:[%s13 + $0x14] sm:$0xf]
    %v1845 = vld [vmem:[%s9 + $0x5] sm:$0x1]
    %v1846 = vlaneseq
    %v1847 = vshrl.u32 %v1846, 7
    %v1848 = vsub.s32 0, %v1847
    %v1849 = vrot.slane %v1845, %v1848
    %v1856 = vunpack.c.l.b16 %v1839
    %v1857 = vunpack.c.l.b16 %v1840
    %v1858 = vunpack.c.l.b16 %v1841
    %v1859 = vunpack.c.l.b16 %v1842
    %v1860 = vunpack.c.l.b16 %v1843
    %v1861 = vunpack.c.l.b16 %v1844
    %v1862 = vpack.c.b16 %v1857, %v1856
    %v1863 = vpack.c.b16 %v1859, %v1858
    %v1864 = vpack.c.b16 %v1861, %v1860
    %v1869 = vsel %vm1638, %v1838, 0
    %1871 = vmatprep.subr.bf16.mxu0 0
    %1872 = vmatpush1.bf16.msra.mxu0 %v1862
    %1873 = vmatprep.subr.bf16.mxu0 0
    %1874 = vmatpush1.bf16.msra.mxu0 %v1863
    %1875 = vmatprep.subr.bf16.mxu0 0
    %1876 = vmatpush1.bf16.msra.mxu0 %v1864
    %1877 = vmatprep.subr.bf16.mxu0 0
    %1878 = vmatpush1.bf16.msra.mxu0 0
    %1879 = vmatprep.subr.bf16.mxu0 0
    %1880 = vmatpush1.bf16.msra.mxu0 0
    %1881 = vmatprep.subr.bf16.mxu0 0
    %1882 = vmatpush1.bf16.msra.mxu0 0
    %1883 = vmatprep.subr.bf16.mxu0 0
    %1884 = vmatpush1.bf16.msra.mxu0 0
    %1885 = vmatprep.subr.bf16.mxu0 0
    %1886 = vmatpush1.bf16.msra.mxu0 0
    %1887 = vmatprep.subr.bf16.mxu0 0
    %1888 = vmatpush1.bf16.msra.mxu0 0
    %1889 = vmatprep.subr.bf16.mxu0 0
    %1890 = vmatpush1.bf16.msra.mxu0 0
    %1891 = vmatprep.subr.bf16.mxu0 0
    %1892 = vmatpush1.bf16.msra.mxu0 0
    %1893 = vmatprep.subr.bf16.mxu0 0
    %1894 = vmatpush1.bf16.msra.mxu0 0
    %1895 = vmatprep.subr.bf16.mxu0 0
    %1896 = vmatpush1.bf16.msra.mxu0 0
    %1897 = vmatprep.subr.bf16.mxu0 0
    %1898 = vmatpush1.bf16.msra.mxu0 0
    %1899 = vmatprep.subr.bf16.mxu0 0
    %1900 = vmatpush1.bf16.msra.mxu0 0
    %1901 = vmatprep.subr.bf16.mxu0 0
    %1902 = vmatpush1.bf16.msra.mxu0 0
    %1903 = vmatprep.mubr.bf16.mxu0 0
    %1904 = vmatmul.mubr.bf16.gmra.mrb[0].mxu0 %v1869
    %v1905 = vpop.f32.mrb[0].mxu0
    %v1906 = vadd.f32 %v1849, %v1905
    %v1907 = vpop.f32.mrb[0].mxu0
    %v1908 = vpop.f32.mrb[0].mxu0
    %v1909 = vadd.f32 %v1849, %v1908
    %v1910 = vpop.f32.mrb[0].mxu0
    %1911 = vdwg.mxu0
    %v1912 = vmax.f32 %v1906, 0.0
    %v1913 = vmax.f32 %v1909, 0.0
    %v1914 = vpack.c.bf16 %v1913, %v1912
    %v1915 = vld [vmem:[%s14] sm:$0xf]
    %v1916 = vld [vmem:[%s14 + $0x4] sm:$0xf]
    %v1917 = vld [vmem:[%s14 + $0x8] sm:$0xf]
    %v1918 = vld [vmem:[%s14 + $0xc] sm:$0xf]
    %v1919 = vld [vmem:[%s14 + $0x10] sm:$0xf]
    %v1920 = vld [vmem:[%s14 + $0x14] sm:$0xf]
    %v1921 = vld [vmem:[%s14 + $0x18] sm:$0xf]
    %v1922 = vld [vmem:[%s14 + $0x1c] sm:$0xf]
    %v1923 = vld [vmem:[%s9 + $0x6] sm:$0x1]
    %v1924 = vlaneseq
    %v1925 = vshrl.u32 %v1924, 7
    %v1926 = vsub.s32 0, %v1925
    %v1927 = vrot.slane %v1923, %v1926
    %v1936 = vunpack.c.l.b16 %v1915
    %v1937 = vunpack.c.l.b16 %v1916
    %v1938 = vunpack.c.l.b16 %v1917
    %v1939 = vunpack.c.l.b16 %v1918
    %v1940 = vunpack.c.l.b16 %v1919
    %v1941 = vunpack.c.l.b16 %v1920
    %v1942 = vunpack.c.l.b16 %v1921
    %v1943 = vunpack.c.l.b16 %v1922
    %v1944 = vpack.c.b16 %v1937, %v1936
    %v1945 = vpack.c.b16 %v1939, %v1938
    %v1946 = vpack.c.b16 %v1941, %v1940
    %v1947 = vpack.c.b16 %v1943, %v1942
    %v1953 = vsel %vm1723, %v1914, 0
    %1955 = vmatprep.subr.bf16.mxu0 0
    %1956 = vmatpush1.bf16.msra.mxu0 %v1944
    %1957 = vmatprep.subr.bf16.mxu0 0
    %1958 = vmatpush1.bf16.msra.mxu0 %v1945
    %1959 = vmatprep.subr.bf16.mxu0 0
    %1960 = vmatpush1.bf16.msra.mxu0 %v1946
    %1961 = vmatprep.subr.bf16.mxu0 0
    %1962 = vmatpush1.bf16.msra.mxu0 %v1947
    %1963 = vmatprep.subr.bf16.mxu0 0
    %1964 = vmatpush1.bf16.msra.mxu0 0
    %1965 = vmatprep.subr.bf16.mxu0 0
    %1966 = vmatpush1.bf16.msra.mxu0 0
    %1967 = vmatprep.subr.bf16.mxu0 0
    %1968 = vmatpush1.bf16.msra.mxu0 0
    %1969 = vmatprep.subr.bf16.mxu0 0
    %1970 = vmatpush1.bf16.msra.mxu0 0
    %1971 = vmatprep.subr.bf16.mxu0 0
    %1972 = vmatpush1.bf16.msra.mxu0 0
    %1973 = vmatprep.subr.bf16.mxu0 0
    %1974 = vmatpush1.bf16.msra.mxu0 0
    %1975 = vmatprep.subr.bf16.mxu0 0
    %1976 = vmatpush1.bf16.msra.mxu0 0
    %1977 = vmatprep.subr.bf16.mxu0 0
    %1978 = vmatpush1.bf16.msra.mxu0 0
    %1979 = vmatprep.subr.bf16.mxu0 0
    %1980 = vmatpush1.bf16.msra.mxu0 0
    %1981 = vmatprep.subr.bf16.mxu0 0
    %1982 = vmatpush1.bf16.msra.mxu0 0
    %1983 = vmatprep.subr.bf16.mxu0 0
    %1984 = vmatpush1.bf16.msra.mxu0 0
    %1985 = vmatprep.subr.bf16.mxu0 0
    %1986 = vmatpush1.bf16.msra.mxu0 0
    %1987 = vmatprep.mubr.bf16.mxu0 0
    %1988 = vmatmul.mubr.bf16.gmra.mrb[0].mxu0 %v1953
    %v1989 = vpop.f32.mrb[0].mxu0
    %v1990 = vadd.f32 %v1927, %v1989
    %v1991 = vpop.f32.mrb[0].mxu0
    %v1992 = vpop.f32.mrb[0].mxu0
    %v1993 = vadd.f32 %v1927, %v1992
    %v1994 = vpop.f32.mrb[0].mxu0
    %1995 = vdwg.mxu0
    %v1996 = vmax.f32 %v1990, 0.0
    %v1997 = vmax.f32 %v1993, 0.0
    %v1998 = vpack.c.bf16 %v1997, %v1996
    %v1999 = vld [vmem:[%s15] sm:$0xf]
    %v2000 = vld [vmem:[%s15 + $0x4] sm:$0xf]
    %v2001 = vld [vmem:[%s15 + $0x8] sm:$0xf]
    %v2002 = vld [vmem:[%s15 + $0xc] sm:$0xf]
    %v2003 = vld [vmem:[%s9 + $0x7] sm:$0x1]
    %v2004 = vlaneseq
    %v2005 = vshrl.u32 %v2004, 7
    %v2006 = vsub.s32 0, %v2005
    %v2007 = vrot.slane %v2003, %v2006
    %v2012 = vunpack.c.l.b16 %v1999
    %v2013 = vunpack.c.l.b16 %v2000
    %v2014 = vunpack.c.l.b16 %v2001
    %v2015 = vunpack.c.l.b16 %v2002
    %v2016 = vpack.c.b16 %v2013, %v2012
    %v2017 = vpack.c.b16 %v2015, %v2014
    %v2021 = vsel %vm1591, %v1998, 0
    %2023 = vmatprep.subr.bf16.mxu0 0
    %2024 = vmatpush1.bf16.msra.mxu0 %v2016
    %2025 = vmatprep.subr.bf16.mxu0 0
    %2026 = vmatpush1.bf16.msra.mxu0 %v2017
    %2027 = vmatprep.subr.bf16.mxu0 0
    %2028 = vmatpush1.bf16.msra.mxu0 0
    %2029 = vmatprep.subr.bf16.mxu0 0
    %2030 = vmatpush1.bf16.msra.mxu0 0
    %2031 = vmatprep.subr.bf16.mxu0 0
    %2032 = vmatpush1.bf16.msra.mxu0 0
    %2033 = vmatprep.subr.bf16.mxu0 0
    %2034 = vmatpush1.bf16.msra.mxu0 0
    %2035 = vmatprep.subr.bf16.mxu0 0
    %2036 = vmatpush1.bf16.msra.mxu0 0
    %2037 = vmatprep.subr.bf16.mxu0 0
    %2038 = vmatpush1.bf16.msra.mxu0 0
    %2039 = vmatprep.subr.bf16.mxu0 0
    %2040 = vmatpush1.bf16.msra.mxu0 0
    %2041 = vmatprep.subr.bf16.mxu0 0
    %2042 = vmatpush1.bf16.msra.mxu0 0
    %2043 = vmatprep.subr.bf16.mxu0 0
    %2044 = vmatpush1.bf16.msra.mxu0 0
    %2045 = vmatprep.subr.bf16.mxu0 0
    %2046 = vmatpush1.bf16.msra.mxu0 0
    %2047 = vmatprep.subr.bf16.mxu0 0
    %2048 = vmatpush1.bf16.msra.mxu0 0
    %2049 = vmatprep.subr.bf16.mxu0 0
    %2050 = vmatpush1.bf16.msra.mxu0 0
    %2051 = vmatprep.subr.bf16.mxu0 0
    %2052 = vmatpush1.bf16.msra.mxu0 0
    %2053 = vmatprep.subr.bf16.mxu0 0
    %2054 = vmatpush1.bf16.msra.mxu0 0
    %2055 = vmatprep.mubr.bf16.mxu0 0
    %2056 = vmatmul.mubr.bf16.gmra.mrb[0].mxu0 %v2021
    %v2057 = vpop.f32.mrb[0].mxu0
    %v2058 = vadd.f32 %v2007, %v2057
    %v2059 = vpop.f32.mrb[0].mxu0
    %v2060 = vpop.f32.mrb[0].mxu0
    %v2061 = vadd.f32 %v2007, %v2060
    %v2062 = vpop.f32.mrb[0].mxu0
    %2063 = vdwg.mxu0
    %v2064 = vpack.c.bf16 %v2061, %v2058
    %v2065 = vld [vmem:[%s16] sm:$0xf]
    %v2066 = vld [vmem:[%s16 + $0x4] sm:$0xf]
    %v2067 = vld [vmem:[%s16 + $0x8] sm:$0xf]
    %v2068 = vld [vmem:[%s16 + $0xc] sm:$0xf]
    %v2069 = vld [vmem:[%s16 + $0x10] sm:$0xf]
    %v2070 = vld [vmem:[%s16 + $0x14] sm:$0xf]
    %v2071 = vld [vmem:[%s9 + $0x8] sm:$0x1]
    %v2072 = vlaneseq
    %v2073 = vshrl.u32 %v2072, 7
    %v2074 = vsub.s32 0, %v2073
    %v2075 = vrot.slane %v2071, %v2074
    %v2082 = vunpack.c.l.b16 %v2065
    %v2083 = vunpack.c.l.b16 %v2066
    %v2084 = vunpack.c.l.b16 %v2067
    %v2085 = vunpack.c.l.b16 %v2068
    %v2086 = vunpack.c.l.b16 %v2069
    %v2087 = vunpack.c.l.b16 %v2070
    %v2088 = vpack.c.b16 %v2083, %v2082
    %v2089 = vpack.c.b16 %v2085, %v2084
    %v2090 = vpack.c.b16 %v2087, %v2086
    %v2095 = vsel %vm1638, %v2064, 0
    %2097 = vmatprep.subr.bf16.mxu0 0
    %2098 = vmatpush1.bf16.msra.mxu0 %v2088
    %2099 = vmatprep.subr.bf16.mxu0 0
    %2100 = vmatpush1.bf16.msra.mxu0 %v2089
    %2101 = vmatprep.subr.bf16.mxu0 0
    %2102 = vmatpush1.bf16.msra.mxu0 %v2090
    %2103 = vmatprep.subr.bf16.mxu0 0
    %2104 = vmatpush1.bf16.msra.mxu0 0
    %2105 = vmatprep.subr.bf16.mxu0 0
    %2106 = vmatpush1.bf16.msra.mxu0 0
    %2107 = vmatprep.subr.bf16.mxu0 0
    %2108 = vmatpush1.bf16.msra.mxu0 0
    %2109 = vmatprep.subr.bf16.mxu0 0
    %2110 = vmatpush1.bf16.msra.mxu0 0
    %2111 = vmatprep.subr.bf16.mxu0 0
    %2112 = vmatpush1.bf16.msra.mxu0 0
    %2113 = vmatprep.subr.bf16.mxu0 0
    %2114 = vmatpush1.bf16.msra.mxu0 0
    %2115 = vmatprep.subr.bf16.mxu0 0
    %2116 = vmatpush1.bf16.msra.mxu0 0
    %2117 = vmatprep.subr.bf16.mxu0 0
    %2118 = vmatpush1.bf16.msra.mxu0 0
    %2119 = vmatprep.subr.bf16.mxu0 0
    %2120 = vmatpush1.bf16.msra.mxu0 0
    %2121 = vmatprep.subr.bf16.mxu0 0
    %2122 = vmatpush1.bf16.msra.mxu0 0
    %2123 = vmatprep.subr.bf16.mxu0 0
    %2124 = vmatpush1.bf16.msra.mxu0 0
    %2125 = vmatprep.subr.bf16.mxu0 0
    %2126 = vmatpush1.bf16.msra.mxu0 0
    %2127 = vmatprep.subr.bf16.mxu0 0
    %2128 = vmatpush1.bf16.msra.mxu0 0
    %2129 = vmatprep.mubr.bf16.mxu0 0
    %2130 = vmatmul.mubr.bf16.gmra.mrb[0].mxu0 %v2095
    %v2131 = vpop.f32.mrb[0].mxu0
    %v2132 = vadd.f32 %v2075, %v2131
    %v2133 = vpop.f32.mrb[0].mxu0
    %v2134 = vpop.f32.mrb[0].mxu0
    %v2135 = vadd.f32 %v2075, %v2134
    %v2136 = vpop.f32.mrb[0].mxu0
    %2137 = vdwg.mxu0
    %v2138 = vmax.f32 %v2132, 0.0
    %v2139 = vmax.f32 %v2135, 0.0
    %v2140 = vpack.c.bf16 %v2139, %v2138
    %v2141 = vld [vmem:[%s17] sm:$0xf]
    %v2142 = vld [vmem:[%s17 + $0x4] sm:$0xf]
    %v2143 = vld [vmem:[%s17 + $0x8] sm:$0xf]
    %v2144 = vld [vmem:[%s17 + $0xc] sm:$0xf]
    %v2145 = vld [vmem:[%s17 + $0x10] sm:$0xf]
    %v2146 = vld [vmem:[%s17 + $0x14] sm:$0xf]
    %v2147 = vld [vmem:[%s17 + $0x18] sm:$0xf]
    %v2148 = vld [vmem:[%s17 + $0x1c] sm:$0xf]
    %v2149 = vld [vmem:[%s9 + $0x9] sm:$0x1]
    %v2150 = vlaneseq
    %v2151 = vshrl.u32 %v2150, 7
    %v2152 = vsub.s32 0, %v2151
    %v2153 = vrot.slane %v2149, %v2152
    %v2162 = vunpack.c.l.b16 %v2141
    %v2163 = vunpack.c.l.b16 %v2142
    %v2164 = vunpack.c.l.b16 %v2143
    %v2165 = vunpack.c.l.b16 %v2144
    %v2166 = vunpack.c.l.b16 %v2145
    %v2167 = vunpack.c.l.b16 %v2146
    %v2168 = vunpack.c.l.b16 %v2147
    %v2169 = vunpack.c.l.b16 %v2148
    %v2170 = vpack.c.b16 %v2163, %v2162
    %v2171 = vpack.c.b16 %v2165, %v2164
    %v2172 = vpack.c.b16 %v2167, %v2166
    %v2173 = vpack.c.b16 %v2169, %v2168
    %v2179 = vsel %vm1723, %v2140, 0
    %2181 = vmatprep.subr.bf16.mxu0 0
    %2182 = vmatpush1.bf16.msra.mxu0 %v2170
    %2183 = vmatprep.subr.bf16.mxu0 0
    %2184 = vmatpush1.bf16.msra.mxu0 %v2171
    %2185 = vmatprep.subr.bf16.mxu0 0
    %2186 = vmatpush1.bf16.msra.mxu0 %v2172
    %2187 = vmatprep.subr.bf16.mxu0 0
    %2188 = vmatpush1.bf16.msra.mxu0 %v2173
    %2189 = vmatprep.subr.bf16.mxu0 0
    %2190 = vmatpush1.bf16.msra.mxu0 0
    %2191 = vmatprep.subr.bf16.mxu0 0
    %2192 = vmatpush1.bf16.msra.mxu0 0
    %2193 = vmatprep.subr.bf16.mxu0 0
    %2194 = vmatpush1.bf16.msra.mxu0 0
    %2195 = vmatprep.subr.bf16.mxu0 0
    %2196 = vmatpush1.bf16.msra.mxu0 0
    %2197 = vmatprep.subr.bf16.mxu0 0
    %2198 = vmatpush1.bf16.msra.mxu0 0
    %2199 = vmatprep.subr.bf16.mxu0 0
    %2200 = vmatpush1.bf16.msra.mxu0 0
    %2201 = vmatprep.subr.bf16.mxu0 0
    %2202 = vmatpush1.bf16.msra.mxu0 0
    %2203 = vmatprep.subr.bf16.mxu0 0
    %2204 = vmatpush1.bf16.msra.mxu0 0
    %2205 = vmatprep.subr.bf16.mxu0 0
    %2206 = vmatpush1.bf16.msra.mxu0 0
    %2207 = vmatprep.subr.bf16.mxu0 0
    %2208 = vmatpush1.bf16.msra.mxu0 0
    %2209 = vmatprep.subr.bf16.mxu0 0
    %2210 = vmatpush1.bf16.msra.mxu0 0
    %2211 = vmatprep.subr.bf16.mxu0 0
    %2212 = vmatpush1.bf16.msra.mxu0 0
    %2213 = vmatprep.mubr.bf16.mxu0 0
    %2214 = vmatmul.mubr.bf16.gmra.mrb[0].mxu0 %v2179
    %v2215 = vpop.f32.mrb[0].mxu0
    %v2216 = vadd.f32 %v2153, %v2215
    %v2217 = vpop.f32.mrb[0].mxu0
    %v2218 = vpop.f32.mrb[0].mxu0
    %v2219 = vadd.f32 %v2153, %v2218
    %v2220 = vpop.f32.mrb[0].mxu0
    %2221 = vdwg.mxu0
    %v2222 = vmax.f32 %v2216, 0.0
    %v2223 = vmax.f32 %v2219, 0.0
    %v2224 = vld [vmem:[%s9 + $0xa] sm:$0x1]
    %v2225 = vlaneseq
    %v2226 = vshrl.u32 %v2225, 7
    %v2227 = vsub.s32 0, %v2226
    %v2228 = vrot.slane %v2224, %v2227
    %v2229 = vmul.f32 %v2222, %v2228
    %v2230 = vmul.f32 %v2223, %v2228
    %v2231 = vsel %vm1591, %v2229, 0.0
    %2232 = vadd.xlane.f32.xlu0 %v2231
    %v2233 = vpop.xlane.xlu0 %2232
    %v2234 = vsel %vm1591, %v2230, 0.0
    %2235 = vadd.xlane.f32.xlu0 %v2234
    %v2236 = vpop.xlane.xlu0 %2235
    %v2237 = vld [vmem:[%s9 + $0xc] sm:$0x1]
    %v2238 = vlaneseq
    %v2239 = vshrl.u32 %v2238, 7
    %v2240 = vsub.s32 0, %v2239
    %v2241 = vrot.slane %v2237, %v2240
    %v2242 = vadd.f32 %v2233, %v2241
    %v2243 = vadd.f32 %v2236, %v2241
    %v2244 = vxor.u32 %v2242, 2147483648
    %v2245 = vxor.u32 %v2243, 2147483648
    %v2246 = vmul.f32 %v2244, 1.442695
    %v2247 = vpow.pop %v2246
    %v2248 = vmul.f32 %v2245, 1.442695
    %v2249 = vpow.pop %v2248
    %v2250 = vadd.f32 %v2247, 1.0
    %v2251 = vadd.f32 %v2249, 1.0
    %v2252 = vrcp.pop %v2250
    %v2253 = vmul.f32 1.0, %v2252
    %v2254 = vrcp.pop %v2251
    %v2255 = vmul.f32 1.0, %v2254
    %vm2256 = vcmask 7168
    %2257 = vst.msk [vmem:[%s18] sm:$0xff] %vm2256, %v2253
    %2258 = vst.msk [vmem:[%s18 + $0x8] sm:$0xff] %vm2256, %v2255
    // Predicated region
    $region78: #{tpu_custom_call.1} parent=1 // pred_check
      _
    $region79: #{tpu_custom_call.1} parent=1 // pred_check_branch
      %2260 = sbr.rel (0) target = $region81
    $region80: #{tpu_custom_call.1} parent=1 // pred_region
      _
    $region81: #{tpu_custom_call.1} parent=1 // pred_fallthru
      _
    // Predicated region
    $region82: #{tpu_custom_call.1} parent=1 // pred_check
      _
    $region83: #{tpu_custom_call.1} parent=1 // pred_check_branch
      %2262 = sbr.rel (0) target = $region85
    $region84: #{tpu_custom_call.1} parent=1 // pred_region
      _
    $region85: #{tpu_custom_call.1} parent=1 // pred_fallthru
      _
    %2263 = vsyncpa [#allocation3], 1

</llo_original>
